<compile_context>
chip_gen: v7x
topology: tpu7x:2x2x1
jax: 0.10.0
libtpu: 0.0.40
codegen_flags: <defaults>
</compile_context>

<pallas_src>
import functools

import jax
import jax.numpy as jnp
from jax import lax
from jax.experimental import pallas as pl
from jax.experimental.pallas import tpu as pltpu

_LANE = 128
_SUBLANE = 8


def _as_bct(x):
    """Normalize input to (B, C, T); squeeze only the explicit singleton axis 1
    (the PyTorch module feeds (B, 1, C, T)), so B == 1 is never squeezed."""
    if x.ndim == 4:
        assert x.shape[1] == 1, f"expected a singleton axis 1, got {x.shape}"
        x = jnp.squeeze(x, axis=1)
    assert x.ndim == 3, f"expected (B, C, T), got {x.shape}"
    return x


def _round_up(v, m):
    return -(-v // m) * m


def _tpu_vmem_capacity():
    """Physical VMEM bytes (128 MiB v5e/v6e, 64 MiB v7x); conservative default."""
    try:
        info = pltpu.get_tpu_info()
        cap = getattr(info, "vmem_capacity_bytes", None)
        if cap:
            return int(cap)
    except Exception:
        pass
    return 64 * 1024 * 1024


def _pick_groups_per_block(num_groups, gc, t, cc, g, itemsize, budget):
    """Groups of G packed batches per grid step, with lane-padding-aware VMEM
    accounting (double-buffered blocks + f32 working copies + packed Gram)."""
    tpad = _round_up(max(t, 1), _LANE)
    gcpad_s = _round_up(gc, _SUBLANE)
    gcpad_l = _round_up(gc, _LANE)
    ccpad = _round_up(cc, _LANE)
    gpad = _round_up(g, _SUBLANE)
    per_group = (
        2 * gcpad_s * tpad * itemsize      # double-buffered input block
        + 2 * gcpad_s * tpad * 4           # f32 copy + centered copy
        + gcpad_s * gcpad_l * 4            # packed Gram
        + 2 * gpad * ccpad * 4             # double-buffered output block
        + 6 * ccpad * 4                    # per-slice temporaries
    )
    ngb = max(1, budget // per_group)
    if num_groups >= 2:
        # >= 2 grid steps: second TensorCore on v7x + DMA/compute overlap.
        ngb = min(ngb, -(-num_groups // 2))
    return int(min(ngb, num_groups)), int(per_group)


def _pick_batches_per_block(batch, c, t, cc, itemsize, budget):
    """Batches per grid step for the unpacked fallback path.  The output block
    is (bb, C*C), so bb must be a multiple of 8 or equal to B."""
    tpad = _round_up(max(t, 1), _LANE)
    cpad_s = _round_up(c, _SUBLANE)
    cpad_l = _round_up(c, _LANE)
    ccpad = _round_up(cc, _LANE)
    per_batch = (
        2 * cpad_s * tpad * itemsize
        + 2 * cpad_s * tpad * 4
        + cpad_s * cpad_l * 4
        + 2 * ccpad * 4
        + 6 * ccpad * 4
    )
    bb = max(1, budget // per_batch)
    bb = min(bb, batch)
    if batch >= 2 * _SUBLANE:
        bb = min(bb, _round_up(-(-batch // 2), _SUBLANE))
    if bb < batch:
        bb = min(batch, max(_SUBLANE, (bb // _SUBLANE) * _SUBLANE))
    return int(bb), int(per_batch)


def _signal2spd_packed_kernel(x_ref, diag_ref, o_ref, *, C, G):
    """x_ref: (ngb, G*C, T) block of G-packed batches; diag_ref: (1, C*C) with
    1.0 at flattened-diagonal positions; o_ref: (ngb, G, C*C) lane-dense."""
    CC = C * C
    x = x_ref[...].astype(jnp.float32)
    mean = jnp.mean(x, axis=-1, keepdims=True)
    xc = x - mean

    # ngb packed Gram matrices on the MXU: (ngb, G*C, G*C).  Only the G
    # diagonal (C, C) blocks are used; the wasted off-diagonal FLOPs are far
    # cheaper than ngb*G serial C-wide matmul push/drain sequences.
    big = lax.dot_general(
        xc, xc,
        dimension_numbers=(((2,), (2,)), ((0,), (0,))),
        preferred_element_type=jnp.float32,
    )

    diag = diag_ref[...]            # (1, CC)
    eps = diag * 1e-5

    for g in range(G):              # static unroll
        lo = g * C
        # Row-major flatten of the g-th diagonal block -> (ngb, C*C),
        # built with a lane-dim concat (well-supported) instead of a
        # minor-dims reshape.
        flat = jnp.concatenate(
            [big[:, lo + i, lo:lo + C] for i in range(C)], axis=-1)
        # trace(cov) == masked sum of the flattened diagonal; the 1/(T-1)
        # factors of cov and trace cancel exactly.
        tra = jnp.sum(flat * diag, axis=-1, keepdims=True)   # (ngb, 1)
        o_ref[:, g, :] = (flat / tra + eps).astype(o_ref.dtype)


def _signal2spd_kernel(x_ref, diag_ref, o_ref, *, C):
    """Fallback (unpacked) path: x_ref (bb, C, T) -> o_ref (bb, C*C)."""
    x = x_ref[...].astype(jnp.float32)
    mean = jnp.mean(x, axis=-1, keepdims=True)
    xc = x - mean

    cov = lax.dot_general(           # (bb, C, C)
        xc, xc,
        dimension_numbers=(((2,), (2,)), ((0,), (0,))),
        preferred_element_type=jnp.float32,
    )
    flat = jnp.concatenate([cov[:, i, :] for i in range(C)], axis=-1)

    diag = diag_ref[...]
    tra = jnp.sum(flat * diag, axis=-1, keepdims=True)
    o_ref[...] = (flat / tra + diag * 1e-5).astype(o_ref.dtype)


def signal2spd(x, batch_block=None):
    """x: (B, C, T) or (B, 1, C, T).  Returns (B, C, C) float32 matching the
    PyTorch per-patch SPD embedding (trace-normalized covariance + 1e-5*I).

    `batch_block` optionally overrides the number of batch elements processed
    per grid step."""
    x = _as_bct(x)
    B, C, T = x.shape
    CC = C * C
    itemsize = jnp.dtype(x.dtype).itemsize

    cap = _tpu_vmem_capacity()
    budget = max(8 << 20, (3 * cap) // 8)   # ~48 MiB on 128 MiB parts, ~24 MiB on v7x

    # 1.0 on the flattened diagonal (positions i*C + i); used both as the
    # trace mask and (scaled by 1e-5) as the diagonal regularizer.
    diag = (jnp.arange(CC, dtype=jnp.int32) % (C + 1) == 0)
    diag = diag.astype(jnp.float32).reshape(1, CC)

    cost = pl.CostEstimate(
        flops=2 * B * C * C * T + 6 * B * C * T,
        transcendentals=0,
        bytes_accessed=B * C * T * itemsize + B * CC * 4,
    )

    # MXU packing factor: G batches per (G*C, T) slab, G*C <= 128.
    G = (_LANE // C) if (C % _SUBLANE == 0 and C <= _LANE // 2) else 1
    use_packed = G > 1 and B % G == 0

    if use_packed:
        NG = B // G
        GC = G * C
        ngb, per_unit = _pick_groups_per_block(NG, GC, T, CC, G, itemsize, budget)
        if batch_block is not None:
            ngb = int(max(1, min(NG, max(int(batch_block), G) // G)))
        est = ngb * per_unit + (2 << 20)
        vmem_limit = int(min((7 * cap) // 8, max(32 << 20, 2 * est)))

        kernel = functools.partial(_signal2spd_packed_kernel, C=C, G=G)
        out = pl.pallas_call(
            kernel,
            out_shape=jax.ShapeDtypeStruct((NG, G, CC), jnp.float32),
            grid_spec=pltpu.PrefetchScalarGridSpec(
                num_scalar_prefetch=0,
                grid=(pl.cdiv(NG, ngb),),
                in_specs=[
                    pl.BlockSpec((ngb, GC, T), lambda n: (n, 0, 0)),
                    pl.BlockSpec((1, CC), lambda n: (0, 0)),
                ],
                out_specs=pl.BlockSpec((ngb, G, CC), lambda n: (n, 0, 0)),
            ),
            compiler_params=pltpu.CompilerParams(
                dimension_semantics=("parallel",),
                vmem_limit_bytes=vmem_limit,
            ),
            cost_estimate=cost,
        )(x.reshape(NG, GC, T), diag)        # zero-copy packing reshape
        return out.reshape(B, C, C)

    # Fallback: per-batch Gram (C not sublane-aligned, or B not a multiple of
    # the packing factor).  Output is still written lane-dense as (B, C*C).
    bb, per_unit = _pick_batches_per_block(B, C, T, CC, itemsize, budget)
    if batch_block is not None:
        bb = int(max(1, min(B, int(batch_block))))
        if bb < B:
            bb = min(B, max(_SUBLANE, (bb // _SUBLANE) * _SUBLANE))
    est = bb * per_unit + (2 << 20)
    vmem_limit = int(min((7 * cap) // 8, max(32 << 20, 2 * est)))

    kernel = functools.partial(_signal2spd_kernel, C=C)
    out = pl.pallas_call(
        kernel,
        out_shape=jax.ShapeDtypeStruct((B, CC), jnp.float32),
        grid_spec=pltpu.PrefetchScalarGridSpec(
            num_scalar_prefetch=0,
            grid=(pl.cdiv(B, bb),),
            in_specs=[
                pl.BlockSpec((bb, C, T), lambda b: (b, 0, 0)),
                pl.BlockSpec((1, CC), lambda b: (0, 0)),
            ],
            out_specs=pl.BlockSpec((bb, CC), lambda b: (b, 0)),
        ),
        compiler_params=pltpu.CompilerParams(
            dimension_semantics=("parallel",),
            vmem_limit_bytes=vmem_limit,
        ),
        cost_estimate=cost,
    )(x, diag)
    return out.reshape(B, C, C)


def _reference(x):
    """Pure-JAX reference mirroring the PyTorch code (f32 throughout)."""
    x = _as_bct(x).astype(jnp.float32)
    T = x.shape[-1]
    mean = jnp.mean(x, axis=-1, keepdims=True)
    xc = x - mean
    cov = jnp.einsum("bct,bdt->bcd", xc, xc,
                     precision=lax.Precision.HIGHEST) / (T - 1)
    tra = jnp.trace(cov, axis1=-2, axis2=-1).reshape(-1, 1, 1)
    cov = cov / tra
    eye = jnp.eye(cov.shape[-1], dtype=cov.dtype)[None]
    return cov + 1e-5 * eye


# TODO(synk): conv blocks (Conv2d/BatchNorm/ELU), grassmann.Orthmap
# (eigendecomposition), QRComposition (QR), FRMap, projection-metric softmax
# attention and the final Linear head of GmAtt_mamem have no clean
# single-kernel Pallas equivalent; only the covariance/SPD embedding hot path
# is kernelized here.


def _check(out, ref, shape):
    assert out.shape == shape, out.shape
    err = float(jnp.max(jnp.abs(out - ref)))
    assert jnp.allclose(out, ref, atol=1e-5, rtol=1e-5), err


if __name__ == "__main__":
    key = jax.random.PRNGKey(0)
    k1, k2, k3, k4 = jax.random.split(key, 4)

    # (B, 1, C, T) as produced upstream of the SPD/covariance embedding stage.
    # B = 8 is a multiple of the packing factor G = 8 -> packed MXU path.
    x1 = jax.random.normal(k1, (8, 1, 16, 64), dtype=jnp.float32)
    out1 = jax.block_until_ready(signal2spd(x1))
    _check(out1, _reference(x1), (8, 16, 16))

    # Packed path with several grid steps and a partial last block
    # (B = 24 -> 3 groups of 8; batch_block = 16 -> 2 groups/step -> grid (2,)).
    x2 = jax.random.normal(k2, (24, 1, 16, 64), dtype=jnp.float32)
    out2 = jax.block_until_ready(signal2spd(x2, batch_block=16))
    _check(out2, _reference(x2), (24, 16, 16))

    # B not a multiple of the packing factor -> unpacked fallback path.
    x3 = jax.random.normal(k3, (6, 1, 16, 64), dtype=jnp.float32)
    out3 = jax.block_until_ready(signal2spd(x3))
    _check(out3, _reference(x3), (6, 16, 16))

    # 3-D input and a channel count that is not sublane-aligned (C = 12).
    x4 = jax.random.normal(k4, (5, 12, 40), dtype=jnp.float32)
    out4 = jax.block_until_ready(signal2spd(x4))
    _check(out4, _reference(x4), (5, 12, 12))

    print("KERNEL_OK")
</pallas_src>

<mosaic_0001>
module attributes {stable_mosaic.version = 11 : i64} {
  func.func @_signal2spd_packed_kernel(%arg0: i32, %arg1: memref<1x128x64xf32, #tpu.memory_space<vmem>>, %arg2: memref<1x256xf32, #tpu.memory_space<vmem>>, %arg3: memref<1x8x256xf32, #tpu.memory_space<vmem>>) attributes {dimension_semantics = [#tpu.dimension_semantics<parallel>], iteration_bounds = array<i64: 1>, scalar_prefetch = 0 : i64, scratch_operands = 0 : i64, tpu.core_type = #tpu.core_type<tc>, window_params = [{transform_indices = @transform_0, window_bounds = array<i64: 1, 128, 64>}, {pipeline_mode = #tpu.pipeline_mode<synchronous>, transform_indices = @transform_1, window_bounds = array<i64: 1, 256>}, {transform_indices = @transform_2, window_bounds = array<i64: 1, 8, 256>}]} {
    %c0 = arith.constant 0 : index
    %c0_0 = arith.constant 0 : index
    %c0_1 = arith.constant 0 : index
    %0 = vector.load %arg1[%c0, %c0_0, %c0_1] : memref<1x128x64xf32, #tpu.memory_space<vmem>>, vector<1x128x64xf32>
    %cst = arith.constant dense<0.000000e+00> : vector<1x128xf32>
    %1 = vector.multi_reduction <add>, %0, %cst [2] : vector<1x128x64xf32> to vector<1x128xf32>
    %2 = vector.shape_cast %1 : vector<1x128xf32> to vector<1x128x1xf32>
    %cst_2 = arith.constant 6.400000e+01 : f32
    %3 = vector.broadcast %cst_2 : f32 to vector<1x128x1xf32>
    %4 = arith.divf %2, %3 : vector<1x128x1xf32>
    %5 = vector.broadcast %4 : vector<1x128x1xf32> to vector<1x128x64xf32>
    %6 = arith.subf %0, %5 : vector<1x128x64xf32>
    %cst_3 = arith.constant dense<0.000000e+00> : vector<1x128x128xf32>
    %7 = tpu.matmul %6, %6, %cst_3 {dimension_numbers = #tpu.dot_dimension_numbers<[2], [2], [1], [1], [0, 0, 0, 1, 1, 1], [0], [0]>} : vector<1x128x64xf32>, vector<1x128x64xf32>, vector<1x128x128xf32> -> vector<1x128x128xf32>
    %c0_4 = arith.constant 0 : index
    %c0_5 = arith.constant 0 : index
    %8 = vector.load %arg2[%c0_4, %c0_5] : memref<1x256xf32, #tpu.memory_space<vmem>>, vector<1x256xf32>
    %cst_6 = arith.constant 9.99999974E-6 : f32
    %9 = vector.broadcast %cst_6 : f32 to vector<1x256xf32>
    %10 = arith.mulf %8, %9 : vector<1x256xf32>
    %11 = vector.extract_strided_slice %7 {offsets = [0, 0, 0], sizes = [1, 1, 16], strides = [1, 1, 1]} : vector<1x128x128xf32> to vector<1x1x16xf32>
    %12 = vector.shape_cast %11 : vector<1x1x16xf32> to vector<1x16xf32>
    %13 = vector.extract_strided_slice %7 {offsets = [0, 1, 0], sizes = [1, 1, 16], strides = [1, 1, 1]} : vector<1x128x128xf32> to vector<1x1x16xf32>
    %14 = vector.shape_cast %13 : vector<1x1x16xf32> to vector<1x16xf32>
    %15 = vector.extract_strided_slice %7 {offsets = [0, 2, 0], sizes = [1, 1, 16], strides = [1, 1, 1]} : vector<1x128x128xf32> to vector<1x1x16xf32>
    %16 = vector.shape_cast %15 : vector<1x1x16xf32> to vector<1x16xf32>
    %17 = vector.extract_strided_slice %7 {offsets = [0, 3, 0], sizes = [1, 1, 16], strides = [1, 1, 1]} : vector<1x128x128xf32> to vector<1x1x16xf32>
    %18 = vector.shape_cast %17 : vector<1x1x16xf32> to vector<1x16xf32>
    %19 = vector.extract_strided_slice %7 {offsets = [0, 4, 0], sizes = [1, 1, 16], strides = [1, 1, 1]} : vector<1x128x128xf32> to vector<1x1x16xf32>
    %20 = vector.shape_cast %19 : vector<1x1x16xf32> to vector<1x16xf32>
    %21 = vector.extract_strided_slice %7 {offsets = [0, 5, 0], sizes = [1, 1, 16], strides = [1, 1, 1]} : vector<1x128x128xf32> to vector<1x1x16xf32>
    %22 = vector.shape_cast %21 : vector<1x1x16xf32> to vector<1x16xf32>
    %23 = vector.extract_strided_slice %7 {offsets = [0, 6, 0], sizes = [1, 1, 16], strides = [1, 1, 1]} : vector<1x128x128xf32> to vector<1x1x16xf32>
    %24 = vector.shape_cast %23 : vector<1x1x16xf32> to vector<1x16xf32>
    %25 = vector.extract_strided_slice %7 {offsets = [0, 7, 0], sizes = [1, 1, 16], strides = [1, 1, 1]} : vector<1x128x128xf32> to vector<1x1x16xf32>
    %26 = vector.shape_cast %25 : vector<1x1x16xf32> to vector<1x16xf32>
    %27 = vector.extract_strided_slice %7 {offsets = [0, 8, 0], sizes = [1, 1, 16], strides = [1, 1, 1]} : vector<1x128x128xf32> to vector<1x1x16xf32>
    %28 = vector.shape_cast %27 : vector<1x1x16xf32> to vector<1x16xf32>
    %29 = vector.extract_strided_slice %7 {offsets = [0, 9, 0], sizes = [1, 1, 16], strides = [1, 1, 1]} : vector<1x128x128xf32> to vector<1x1x16xf32>
    %30 = vector.shape_cast %29 : vector<1x1x16xf32> to vector<1x16xf32>
    %31 = vector.extract_strided_slice %7 {offsets = [0, 10, 0], sizes = [1, 1, 16], strides = [1, 1, 1]} : vector<1x128x128xf32> to vector<1x1x16xf32>
    %32 = vector.shape_cast %31 : vector<1x1x16xf32> to vector<1x16xf32>
    %33 = vector.extract_strided_slice %7 {offsets = [0, 11, 0], sizes = [1, 1, 16], strides = [1, 1, 1]} : vector<1x128x128xf32> to vector<1x1x16xf32>
    %34 = vector.shape_cast %33 : vector<1x1x16xf32> to vector<1x16xf32>
    %35 = vector.extract_strided_slice %7 {offsets = [0, 12, 0], sizes = [1, 1, 16], strides = [1, 1, 1]} : vector<1x128x128xf32> to vector<1x1x16xf32>
    %36 = vector.shape_cast %35 : vector<1x1x16xf32> to vector<1x16xf32>
    %37 = vector.extract_strided_slice %7 {offsets = [0, 13, 0], sizes = [1, 1, 16], strides = [1, 1, 1]} : vector<1x128x128xf32> to vector<1x1x16xf32>
    %38 = vector.shape_cast %37 : vector<1x1x16xf32> to vector<1x16xf32>
    %39 = vector.extract_strided_slice %7 {offsets = [0, 14, 0], sizes = [1, 1, 16], strides = [1, 1, 1]} : vector<1x128x128xf32> to vector<1x1x16xf32>
    %40 = vector.shape_cast %39 : vector<1x1x16xf32> to vector<1x16xf32>
    %41 = vector.extract_strided_slice %7 {offsets = [0, 15, 0], sizes = [1, 1, 16], strides = [1, 1, 1]} : vector<1x128x128xf32> to vector<1x1x16xf32>
    %42 = vector.shape_cast %41 : vector<1x1x16xf32> to vector<1x16xf32>
    %43 = tpu.concatenate %12, %14, %16, %18, %20, %22, %24, %26, %28, %30, %32, %34, %36, %38, %40, %42 in 1 : vector<1x16xf32>, vector<1x16xf32>, vector<1x16xf32>, vector<1x16xf32>, vector<1x16xf32>, vector<1x16xf32>, vector<1x16xf32>, vector<1x16xf32>, vector<1x16xf32>, vector<1x16xf32>, vector<1x16xf32>, vector<1x16xf32>, vector<1x16xf32>, vector<1x16xf32>, vector<1x16xf32>, vector<1x16xf32> -> vector<1x256xf32>
    %44 = arith.mulf %43, %8 : vector<1x256xf32>
    %cst_7 = arith.constant dense<0.000000e+00> : vector<1xf32>
    %45 = vector.multi_reduction <add>, %44, %cst_7 [1] : vector<1x256xf32> to vector<1xf32>
    %46 = vector.shape_cast %45 : vector<1xf32> to vector<1x1xf32>
    %47 = vector.broadcast %46 : vector<1x1xf32> to vector<1x256xf32>
    %48 = arith.divf %43, %47 : vector<1x256xf32>
    %49 = arith.addf %48, %10 : vector<1x256xf32>
    %c0_8 = arith.constant 0 : index
    %c0_9 = arith.constant 0 : index
    %c0_10 = arith.constant 0 : index
    %50 = vector.load %arg3[%c0_8, %c0_9, %c0_10] : memref<1x8x256xf32, #tpu.memory_space<vmem>>, vector<1x1x256xf32>
    %51 = vector.shape_cast %50 : vector<1x1x256xf32> to vector<1x256xf32>
    %52 = vector.shape_cast %49 : vector<1x256xf32> to vector<1x1x256xf32>
    tpu.vector_store %arg3[%c0_8, %c0_9, %c0_10], %52 {strides = array<i32>} : memref<1x8x256xf32, #tpu.memory_space<vmem>>, vector<1x1x256xf32>,
    %53 = vector.extract_strided_slice %7 {offsets = [0, 16, 16], sizes = [1, 1, 16], strides = [1, 1, 1]} : vector<1x128x128xf32> to vector<1x1x16xf32>
    %54 = vector.shape_cast %53 : vector<1x1x16xf32> to vector<1x16xf32>
    %55 = vector.extract_strided_slice %7 {offsets = [0, 17, 16], sizes = [1, 1, 16], strides = [1, 1, 1]} : vector<1x128x128xf32> to vector<1x1x16xf32>
    %56 = vector.shape_cast %55 : vector<1x1x16xf32> to vector<1x16xf32>
    %57 = vector.extract_strided_slice %7 {offsets = [0, 18, 16], sizes = [1, 1, 16], strides = [1, 1, 1]} : vector<1x128x128xf32> to vector<1x1x16xf32>
    %58 = vector.shape_cast %57 : vector<1x1x16xf32> to vector<1x16xf32>
    %59 = vector.extract_strided_slice %7 {offsets = [0, 19, 16], sizes = [1, 1, 16], strides = [1, 1, 1]} : vector<1x128x128xf32> to vector<1x1x16xf32>
    %60 = vector.shape_cast %59 : vector<1x1x16xf32> to vector<1x16xf32>
    %61 = vector.extract_strided_slice %7 {offsets = [0, 20, 16], sizes = [1, 1, 16], strides = [1, 1, 1]} : vector<1x128x128xf32> to vector<1x1x16xf32>
    %62 = vector.shape_cast %61 : vector<1x1x16xf32> to vector<1x16xf32>
    %63 = vector.extract_strided_slice %7 {offsets = [0, 21, 16], sizes = [1, 1, 16], strides = [1, 1, 1]} : vector<1x128x128xf32> to vector<1x1x16xf32>
    %64 = vector.shape_cast %63 : vector<1x1x16xf32> to vector<1x16xf32>
    %65 = vector.extract_strided_slice %7 {offsets = [0, 22, 16], sizes = [1, 1, 16], strides = [1, 1, 1]} : vector<1x128x128xf32> to vector<1x1x16xf32>
    %66 = vector.shape_cast %65 : vector<1x1x16xf32> to vector<1x16xf32>
    %67 = vector.extract_strided_slice %7 {offsets = [0, 23, 16], sizes = [1, 1, 16], strides = [1, 1, 1]} : vector<1x128x128xf32> to vector<1x1x16xf32>
    %68 = vector.shape_cast %67 : vector<1x1x16xf32> to vector<1x16xf32>
    %69 = vector.extract_strided_slice %7 {offsets = [0, 24, 16], sizes = [1, 1, 16], strides = [1, 1, 1]} : vector<1x128x128xf32> to vector<1x1x16xf32>
    %70 = vector.shape_cast %69 : vector<1x1x16xf32> to vector<1x16xf32>
    %71 = vector.extract_strided_slice %7 {offsets = [0, 25, 16], sizes = [1, 1, 16], strides = [1, 1, 1]} : vector<1x128x128xf32> to vector<1x1x16xf32>
    %72 = vector.shape_cast %71 : vector<1x1x16xf32> to vector<1x16xf32>
    %73 = vector.extract_strided_slice %7 {offsets = [0, 26, 16], sizes = [1, 1, 16], strides = [1, 1, 1]} : vector<1x128x128xf32> to vector<1x1x16xf32>
    %74 = vector.shape_cast %73 : vector<1x1x16xf32> to vector<1x16xf32>
    %75 = vector.extract_strided_slice %7 {offsets = [0, 27, 16], sizes = [1, 1, 16], strides = [1, 1, 1]} : vector<1x128x128xf32> to vector<1x1x16xf32>
    %76 = vector.shape_cast %75 : vector<1x1x16xf32> to vector<1x16xf32>
    %77 = vector.extract_strided_slice %7 {offsets = [0, 28, 16], sizes = [1, 1, 16], strides = [1, 1, 1]} : vector<1x128x128xf32> to vector<1x1x16xf32>
    %78 = vector.shape_cast %77 : vector<1x1x16xf32> to vector<1x16xf32>
    %79 = vector.extract_strided_slice %7 {offsets = [0, 29, 16], sizes = [1, 1, 16], strides = [1, 1, 1]} : vector<1x128x128xf32> to vector<1x1x16xf32>
    %80 = vector.shape_cast %79 : vector<1x1x16xf32> to vector<1x16xf32>
    %81 = vector.extract_strided_slice %7 {offsets = [0, 30, 16], sizes = [1, 1, 16], strides = [1, 1, 1]} : vector<1x128x128xf32> to vector<1x1x16xf32>
    %82 = vector.shape_cast %81 : vector<1x1x16xf32> to vector<1x16xf32>
    %83 = vector.extract_strided_slice %7 {offsets = [0, 31, 16], sizes = [1, 1, 16], strides = [1, 1, 1]} : vector<1x128x128xf32> to vector<1x1x16xf32>
    %84 = vector.shape_cast %83 : vector<1x1x16xf32> to vector<1x16xf32>
    %85 = tpu.concatenate %54, %56, %58, %60, %62, %64, %66, %68, %70, %72, %74, %76, %78, %80, %82, %84 in 1 : vector<1x16xf32>, vector<1x16xf32>, vector<1x16xf32>, vector<1x16xf32>, vector<1x16xf32>, vector<1x16xf32>, vector<1x16xf32>, vector<1x16xf32>, vector<1x16xf32>, vector<1x16xf32>, vector<1x16xf32>, vector<1x16xf32>, vector<1x16xf32>, vector<1x16xf32>, vector<1x16xf32>, vector<1x16xf32> -> vector<1x256xf32>
    %86 = arith.mulf %85, %8 : vector<1x256xf32>
    %cst_11 = arith.constant dense<0.000000e+00> : vector<1xf32>
    %87 = vector.multi_reduction <add>, %86, %cst_11 [1] : vector<1x256xf32> to vector<1xf32>
    %88 = vector.shape_cast %87 : vector<1xf32> to vector<1x1xf32>
    %89 = vector.broadcast %88 : vector<1x1xf32> to vector<1x256xf32>
    %90 = arith.divf %85, %89 : vector<1x256xf32>
    %91 = arith.addf %90, %10 : vector<1x256xf32>
    %c0_12 = arith.constant 0 : index
    %c1 = arith.constant 1 : index
    %c0_13 = arith.constant 0 : index
    %92 = vector.load %arg3[%c0_12, %c1, %c0_13] : memref<1x8x256xf32, #tpu.memory_space<vmem>>, vector<1x1x256xf32>
    %93 = vector.shape_cast %92 : vector<1x1x256xf32> to vector<1x256xf32>
    %94 = vector.shape_cast %91 : vector<1x256xf32> to vector<1x1x256xf32>
    tpu.vector_store %arg3[%c0_12, %c1, %c0_13], %94 {strides = array<i32>} : memref<1x8x256xf32, #tpu.memory_space<vmem>>, vector<1x1x256xf32>,
    %95 = vector.extract_strided_slice %7 {offsets = [0, 32, 32], sizes = [1, 1, 16], strides = [1, 1, 1]} : vector<1x128x128xf32> to vector<1x1x16xf32>
    %96 = vector.shape_cast %95 : vector<1x1x16xf32> to vector<1x16xf32>
    %97 = vector.extract_strided_slice %7 {offsets = [0, 33, 32], sizes = [1, 1, 16], strides = [1, 1, 1]} : vector<1x128x128xf32> to vector<1x1x16xf32>
    %98 = vector.shape_cast %97 : vector<1x1x16xf32> to vector<1x16xf32>
    %99 = vector.extract_strided_slice %7 {offsets = [0, 34, 32], sizes = [1, 1, 16], strides = [1, 1, 1]} : vector<1x128x128xf32> to vector<1x1x16xf32>
    %100 = vector.shape_cast %99 : vector<1x1x16xf32> to vector<1x16xf32>
    %101 = vector.extract_strided_slice %7 {offsets = [0, 35, 32], sizes = [1, 1, 16], strides = [1, 1, 1]} : vector<1x128x128xf32> to vector<1x1x16xf32>
    %102 = vector.shape_cast %101 : vector<1x1x16xf32> to vector<1x16xf32>
    %103 = vector.extract_strided_slice %7 {offsets = [0, 36, 32], sizes = [1, 1, 16], strides = [1, 1, 1]} : vector<1x128x128xf32> to vector<1x1x16xf32>
    %104 = vector.shape_cast %103 : vector<1x1x16xf32> to vector<1x16xf32>
    %105 = vector.extract_strided_slice %7 {offsets = [0, 37, 32], sizes = [1, 1, 16], strides = [1, 1, 1]} : vector<1x128x128xf32> to vector<1x1x16xf32>
    %106 = vector.shape_cast %105 : vector<1x1x16xf32> to vector<1x16xf32>
    %107 = vector.extract_strided_slice %7 {offsets = [0, 38, 32], sizes = [1, 1, 16], strides = [1, 1, 1]} : vector<1x128x128xf32> to vector<1x1x16xf32>
    %108 = vector.shape_cast %107 : vector<1x1x16xf32> to vector<1x16xf32>
    %109 = vector.extract_strided_slice %7 {offsets = [0, 39, 32], sizes = [1, 1, 16], strides = [1, 1, 1]} : vector<1x128x128xf32> to vector<1x1x16xf32>
    %110 = vector.shape_cast %109 : vector<1x1x16xf32> to vector<1x16xf32>
    %111 = vector.extract_strided_slice %7 {offsets = [0, 40, 32], sizes = [1, 1, 16], strides = [1, 1, 1]} : vector<1x128x128xf32> to vector<1x1x16xf32>
    %112 = vector.shape_cast %111 : vector<1x1x16xf32> to vector<1x16xf32>
    %113 = vector.extract_strided_slice %7 {offsets = [0, 41, 32], sizes = [1, 1, 16], strides = [1, 1, 1]} : vector<1x128x128xf32> to vector<1x1x16xf32>
    %114 = vector.shape_cast %113 : vector<1x1x16xf32> to vector<1x16xf32>
    %115 = vector.extract_strided_slice %7 {offsets = [0, 42, 32], sizes = [1, 1, 16], strides = [1, 1, 1]} : vector<1x128x128xf32> to vector<1x1x16xf32>
    %116 = vector.shape_cast %115 : vector<1x1x16xf32> to vector<1x16xf32>
    %117 = vector.extract_strided_slice %7 {offsets = [0, 43, 32], sizes = [1, 1, 16], strides = [1, 1, 1]} : vector<1x128x128xf32> to vector<1x1x16xf32>
    %118 = vector.shape_cast %117 : vector<1x1x16xf32> to vector<1x16xf32>
    %119 = vector.extract_strided_slice %7 {offsets = [0, 44, 32], sizes = [1, 1, 16], strides = [1, 1, 1]} : vector<1x128x128xf32> to vector<1x1x16xf32>
    %120 = vector.shape_cast %119 : vector<1x1x16xf32> to vector<1x16xf32>
    %121 = vector.extract_strided_slice %7 {offsets = [0, 45, 32], sizes = [1, 1, 16], strides = [1, 1, 1]} : vector<1x128x128xf32> to vector<1x1x16xf32>
    %122 = vector.shape_cast %121 : vector<1x1x16xf32> to vector<1x16xf32>
    %123 = vector.extract_strided_slice %7 {offsets = [0, 46, 32], sizes = [1, 1, 16], strides = [1, 1, 1]} : vector<1x128x128xf32> to vector<1x1x16xf32>
    %124 = vector.shape_cast %123 : vector<1x1x16xf32> to vector<1x16xf32>
    %125 = vector.extract_strided_slice %7 {offsets = [0, 47, 32], sizes = [1, 1, 16], strides = [1, 1, 1]} : vector<1x128x128xf32> to vector<1x1x16xf32>
    %126 = vector.shape_cast %125 : vector<1x1x16xf32> to vector<1x16xf32>
    %127 = tpu.concatenate %96, %98, %100, %102, %104, %106, %108, %110, %112, %114, %116, %118, %120, %122, %124, %126 in 1 : vector<1x16xf32>, vector<1x16xf32>, vector<1x16xf32>, vector<1x16xf32>, vector<1x16xf32>, vector<1x16xf32>, vector<1x16xf32>, vector<1x16xf32>, vector<1x16xf32>, vector<1x16xf32>, vector<1x16xf32>, vector<1x16xf32>, vector<1x16xf32>, vector<1x16xf32>, vector<1x16xf32>, vector<1x16xf32> -> vector<1x256xf32>
    %128 = arith.mulf %127, %8 : vector<1x256xf32>
    %cst_14 = arith.constant dense<0.000000e+00> : vector<1xf32>
    %129 = vector.multi_reduction <add>, %128, %cst_14 [1] : vector<1x256xf32> to vector<1xf32>
    %130 = vector.shape_cast %129 : vector<1xf32> to vector<1x1xf32>
    %131 = vector.broadcast %130 : vector<1x1xf32> to vector<1x256xf32>
    %132 = arith.divf %127, %131 : vector<1x256xf32>
    %133 = arith.addf %132, %10 : vector<1x256xf32>
    %c0_15 = arith.constant 0 : index
    %c2 = arith.constant 2 : index
    %c0_16 = arith.constant 0 : index
    %134 = vector.load %arg3[%c0_15, %c2, %c0_16] : memref<1x8x256xf32, #tpu.memory_space<vmem>>, vector<1x1x256xf32>
    %135 = vector.shape_cast %134 : vector<1x1x256xf32> to vector<1x256xf32>
    %136 = vector.shape_cast %133 : vector<1x256xf32> to vector<1x1x256xf32>
    tpu.vector_store %arg3[%c0_15, %c2, %c0_16], %136 {strides = array<i32>} : memref<1x8x256xf32, #tpu.memory_space<vmem>>, vector<1x1x256xf32>,
    %137 = vector.extract_strided_slice %7 {offsets = [0, 48, 48], sizes = [1, 1, 16], strides = [1, 1, 1]} : vector<1x128x128xf32> to vector<1x1x16xf32>
    %138 = vector.shape_cast %137 : vector<1x1x16xf32> to vector<1x16xf32>
    %139 = vector.extract_strided_slice %7 {offsets = [0, 49, 48], sizes = [1, 1, 16], strides = [1, 1, 1]} : vector<1x128x128xf32> to vector<1x1x16xf32>
    %140 = vector.shape_cast %139 : vector<1x1x16xf32> to vector<1x16xf32>
    %141 = vector.extract_strided_slice %7 {offsets = [0, 50, 48], sizes = [1, 1, 16], strides = [1, 1, 1]} : vector<1x128x128xf32> to vector<1x1x16xf32>
    %142 = vector.shape_cast %141 : vector<1x1x16xf32> to vector<1x16xf32>
    %143 = vector.extract_strided_slice %7 {offsets = [0, 51, 48], sizes = [1, 1, 16], strides = [1, 1, 1]} : vector<1x128x128xf32> to vector<1x1x16xf32>
    %144 = vector.shape_cast %143 : vector<1x1x16xf32> to vector<1x16xf32>
    %145 = vector.extract_strided_slice %7 {offsets = [0, 52, 48], sizes = [1, 1, 16], strides = [1, 1, 1]} : vector<1x128x128xf32> to vector<1x1x16xf32>
    %146 = vector.shape_cast %145 : vector<1x1x16xf32> to vector<1x16xf32>
    %147 = vector.extract_strided_slice %7 {offsets = [0, 53, 48], sizes = [1, 1, 16], strides = [1, 1, 1]} : vector<1x128x128xf32> to vector<1x1x16xf32>
    %148 = vector.shape_cast %147 : vector<1x1x16xf32> to vector<1x16xf32>
    %149 = vector.extract_strided_slice %7 {offsets = [0, 54, 48], sizes = [1, 1, 16], strides = [1, 1, 1]} : vector<1x128x128xf32> to vector<1x1x16xf32>
    %150 = vector.shape_cast %149 : vector<1x1x16xf32> to vector<1x16xf32>
    %151 = vector.extract_strided_slice %7 {offsets = [0, 55, 48], sizes = [1, 1, 16], strides = [1, 1, 1]} : vector<1x128x128xf32> to vector<1x1x16xf32>
    %152 = vector.shape_cast %151 : vector<1x1x16xf32> to vector<1x16xf32>
    %153 = vector.extract_strided_slice %7 {offsets = [0, 56, 48], sizes = [1, 1, 16], strides = [1, 1, 1]} : vector<1x128x128xf32> to vector<1x1x16xf32>
    %154 = vector.shape_cast %153 : vector<1x1x16xf32> to vector<1x16xf32>
    %155 = vector.extract_strided_slice %7 {offsets = [0, 57, 48], sizes = [1, 1, 16], strides = [1, 1, 1]} : vector<1x128x128xf32> to vector<1x1x16xf32>
    %156 = vector.shape_cast %155 : vector<1x1x16xf32> to vector<1x16xf32>
    %157 = vector.extract_strided_slice %7 {offsets = [0, 58, 48], sizes = [1, 1, 16], strides = [1, 1, 1]} : vector<1x128x128xf32> to vector<1x1x16xf32>
    %158 = vector.shape_cast %157 : vector<1x1x16xf32> to vector<1x16xf32>
    %159 = vector.extract_strided_slice %7 {offsets = [0, 59, 48], sizes = [1, 1, 16], strides = [1, 1, 1]} : vector<1x128x128xf32> to vector<1x1x16xf32>
    %160 = vector.shape_cast %159 : vector<1x1x16xf32> to vector<1x16xf32>
    %161 = vector.extract_strided_slice %7 {offsets = [0, 60, 48], sizes = [1, 1, 16], strides = [1, 1, 1]} : vector<1x128x128xf32> to vector<1x1x16xf32>
    %162 = vector.shape_cast %161 : vector<1x1x16xf32> to vector<1x16xf32>
    %163 = vector.extract_strided_slice %7 {offsets = [0, 61, 48], sizes = [1, 1, 16], strides = [1, 1, 1]} : vector<1x128x128xf32> to vector<1x1x16xf32>
    %164 = vector.shape_cast %163 : vector<1x1x16xf32> to vector<1x16xf32>
    %165 = vector.extract_strided_slice %7 {offsets = [0, 62, 48], sizes = [1, 1, 16], strides = [1, 1, 1]} : vector<1x128x128xf32> to vector<1x1x16xf32>
    %166 = vector.shape_cast %165 : vector<1x1x16xf32> to vector<1x16xf32>
    %167 = vector.extract_strided_slice %7 {offsets = [0, 63, 48], sizes = [1, 1, 16], strides = [1, 1, 1]} : vector<1x128x128xf32> to vector<1x1x16xf32>
    %168 = vector.shape_cast %167 : vector<1x1x16xf32> to vector<1x16xf32>
    %169 = tpu.concatenate %138, %140, %142, %144, %146, %148, %150, %152, %154, %156, %158, %160, %162, %164, %166, %168 in 1 : vector<1x16xf32>, vector<1x16xf32>, vector<1x16xf32>, vector<1x16xf32>, vector<1x16xf32>, vector<1x16xf32>, vector<1x16xf32>, vector<1x16xf32>, vector<1x16xf32>, vector<1x16xf32>, vector<1x16xf32>, vector<1x16xf32>, vector<1x16xf32>, vector<1x16xf32>, vector<1x16xf32>, vector<1x16xf32> -> vector<1x256xf32>
    %170 = arith.mulf %169, %8 : vector<1x256xf32>
    %cst_17 = arith.constant dense<0.000000e+00> : vector<1xf32>
    %171 = vector.multi_reduction <add>, %170, %cst_17 [1] : vector<1x256xf32> to vector<1xf32>
    %172 = vector.shape_cast %171 : vector<1xf32> to vector<1x1xf32>
    %173 = vector.broadcast %172 : vector<1x1xf32> to vector<1x256xf32>
    %174 = arith.divf %169, %173 : vector<1x256xf32>
    %175 = arith.addf %174, %10 : vector<1x256xf32>
    %c0_18 = arith.constant 0 : index
    %c3 = arith.constant 3 : index
    %c0_19 = arith.constant 0 : index
    %176 = vector.load %arg3[%c0_18, %c3, %c0_19] : memref<1x8x256xf32, #tpu.memory_space<vmem>>, vector<1x1x256xf32>
    %177 = vector.shape_cast %176 : vector<1x1x256xf32> to vector<1x256xf32>
    %178 = vector.shape_cast %175 : vector<1x256xf32> to vector<1x1x256xf32>
    tpu.vector_store %arg3[%c0_18, %c3, %c0_19], %178 {strides = array<i32>} : memref<1x8x256xf32, #tpu.memory_space<vmem>>, vector<1x1x256xf32>,
    %179 = vector.extract_strided_slice %7 {offsets = [0, 64, 64], sizes = [1, 1, 16], strides = [1, 1, 1]} : vector<1x128x128xf32> to vector<1x1x16xf32>
    %180 = vector.shape_cast %179 : vector<1x1x16xf32> to vector<1x16xf32>
    %181 = vector.extract_strided_slice %7 {offsets = [0, 65, 64], sizes = [1, 1, 16], strides = [1, 1, 1]} : vector<1x128x128xf32> to vector<1x1x16xf32>
    %182 = vector.shape_cast %181 : vector<1x1x16xf32> to vector<1x16xf32>
    %183 = vector.extract_strided_slice %7 {offsets = [0, 66, 64], sizes = [1, 1, 16], strides = [1, 1, 1]} : vector<1x128x128xf32> to vector<1x1x16xf32>
    %184 = vector.shape_cast %183 : vector<1x1x16xf32> to vector<1x16xf32>
    %185 = vector.extract_strided_slice %7 {offsets = [0, 67, 64], sizes = [1, 1, 16], strides = [1, 1, 1]} : vector<1x128x128xf32> to vector<1x1x16xf32>
    %186 = vector.shape_cast %185 : vector<1x1x16xf32> to vector<1x16xf32>
    %187 = vector.extract_strided_slice %7 {offsets = [0, 68, 64], sizes = [1, 1, 16], strides = [1, 1, 1]} : vector<1x128x128xf32> to vector<1x1x16xf32>
    %188 = vector.shape_cast %187 : vector<1x1x16xf32> to vector<1x16xf32>
    %189 = vector.extract_strided_slice %7 {offsets = [0, 69, 64], sizes = [1, 1, 16], strides = [1, 1, 1]} : vector<1x128x128xf32> to vector<1x1x16xf32>
    %190 = vector.shape_cast %189 : vector<1x1x16xf32> to vector<1x16xf32>
    %191 = vector.extract_strided_slice %7 {offsets = [0, 70, 64], sizes = [1, 1, 16], strides = [1, 1, 1]} : vector<1x128x128xf32> to vector<1x1x16xf32>
    %192 = vector.shape_cast %191 : vector<1x1x16xf32> to vector<1x16xf32>
    %193 = vector.extract_strided_slice %7 {offsets = [0, 71, 64], sizes = [1, 1, 16], strides = [1, 1, 1]} : vector<1x128x128xf32> to vector<1x1x16xf32>
    %194 = vector.shape_cast %193 : vector<1x1x16xf32> to vector<1x16xf32>
    %195 = vector.extract_strided_slice %7 {offsets = [0, 72, 64], sizes = [1, 1, 16], strides = [1, 1, 1]} : vector<1x128x128xf32> to vector<1x1x16xf32>
    %196 = vector.shape_cast %195 : vector<1x1x16xf32> to vector<1x16xf32>
    %197 = vector.extract_strided_slice %7 {offsets = [0, 73, 64], sizes = [1, 1, 16], strides = [1, 1, 1]} : vector<1x128x128xf32> to vector<1x1x16xf32>
    %198 = vector.shape_cast %197 : vector<1x1x16xf32> to vector<1x16xf32>
    %199 = vector.extract_strided_slice %7 {offsets = [0, 74, 64], sizes = [1, 1, 16], strides = [1, 1, 1]} : vector<1x128x128xf32> to vector<1x1x16xf32>
    %200 = vector.shape_cast %199 : vector<1x1x16xf32> to vector<1x16xf32>
    %201 = vector.extract_strided_slice %7 {offsets = [0, 75, 64], sizes = [1, 1, 16], strides = [1, 1, 1]} : vector<1x128x128xf32> to vector<1x1x16xf32>
    %202 = vector.shape_cast %201 : vector<1x1x16xf32> to vector<1x16xf32>
    %203 = vector.extract_strided_slice %7 {offsets = [0, 76, 64], sizes = [1, 1, 16], strides = [1, 1, 1]} : vector<1x128x128xf32> to vector<1x1x16xf32>
    %204 = vector.shape_cast %203 : vector<1x1x16xf32> to vector<1x16xf32>
    %205 = vector.extract_strided_slice %7 {offsets = [0, 77, 64], sizes = [1, 1, 16], strides = [1, 1, 1]} : vector<1x128x128xf32> to vector<1x1x16xf32>
    %206 = vector.shape_cast %205 : vector<1x1x16xf32> to vector<1x16xf32>
    %207 = vector.extract_strided_slice %7 {offsets = [0, 78, 64], sizes = [1, 1, 16], strides = [1, 1, 1]} : vector<1x128x128xf32> to vector<1x1x16xf32>
    %208 = vector.shape_cast %207 : vector<1x1x16xf32> to vector<1x16xf32>
    %209 = vector.extract_strided_slice %7 {offsets = [0, 79, 64], sizes = [1, 1, 16], strides = [1, 1, 1]} : vector<1x128x128xf32> to vector<1x1x16xf32>
    %210 = vector.shape_cast %209 : vector<1x1x16xf32> to vector<1x16xf32>
    %211 = tpu.concatenate %180, %182, %184, %186, %188, %190, %192, %194, %196, %198, %200, %202, %204, %206, %208, %210 in 1 : vector<1x16xf32>, vector<1x16xf32>, vector<1x16xf32>, vector<1x16xf32>, vector<1x16xf32>, vector<1x16xf32>, vector<1x16xf32>, vector<1x16xf32>, vector<1x16xf32>, vector<1x16xf32>, vector<1x16xf32>, vector<1x16xf32>, vector<1x16xf32>, vector<1x16xf32>, vector<1x16xf32>, vector<1x16xf32> -> vector<1x256xf32>
    %212 = arith.mulf %211, %8 : vector<1x256xf32>
    %cst_20 = arith.constant dense<0.000000e+00> : vector<1xf32>
    %213 = vector.multi_reduction <add>, %212, %cst_20 [1] : vector<1x256xf32> to vector<1xf32>
    %214 = vector.shape_cast %213 : vector<1xf32> to vector<1x1xf32>
    %215 = vector.broadcast %214 : vector<1x1xf32> to vector<1x256xf32>
    %216 = arith.divf %211, %215 : vector<1x256xf32>
    %217 = arith.addf %216, %10 : vector<1x256xf32>
    %c0_21 = arith.constant 0 : index
    %c4 = arith.constant 4 : index
    %c0_22 = arith.constant 0 : index
    %218 = vector.load %arg3[%c0_21, %c4, %c0_22] : memref<1x8x256xf32, #tpu.memory_space<vmem>>, vector<1x1x256xf32>
    %219 = vector.shape_cast %218 : vector<1x1x256xf32> to vector<1x256xf32>
    %220 = vector.shape_cast %217 : vector<1x256xf32> to vector<1x1x256xf32>
    tpu.vector_store %arg3[%c0_21, %c4, %c0_22], %220 {strides = array<i32>} : memref<1x8x256xf32, #tpu.memory_space<vmem>>, vector<1x1x256xf32>,
    %221 = vector.extract_strided_slice %7 {offsets = [0, 80, 80], sizes = [1, 1, 16], strides = [1, 1, 1]} : vector<1x128x128xf32> to vector<1x1x16xf32>
    %222 = vector.shape_cast %221 : vector<1x1x16xf32> to vector<1x16xf32>
    %223 = vector.extract_strided_slice %7 {offsets = [0, 81, 80], sizes = [1, 1, 16], strides = [1, 1, 1]} : vector<1x128x128xf32> to vector<1x1x16xf32>
    %224 = vector.shape_cast %223 : vector<1x1x16xf32> to vector<1x16xf32>
    %225 = vector.extract_strided_slice %7 {offsets = [0, 82, 80], sizes = [1, 1, 16], strides = [1, 1, 1]} : vector<1x128x128xf32> to vector<1x1x16xf32>
    %226 = vector.shape_cast %225 : vector<1x1x16xf32> to vector<1x16xf32>
    %227 = vector.extract_strided_slice %7 {offsets = [0, 83, 80], sizes = [1, 1, 16], strides = [1, 1, 1]} : vector<1x128x128xf32> to vector<1x1x16xf32>
    %228 = vector.shape_cast %227 : vector<1x1x16xf32> to vector<1x16xf32>
    %229 = vector.extract_strided_slice %7 {offsets = [0, 84, 80], sizes = [1, 1, 16], strides = [1, 1, 1]} : vector<1x128x128xf32> to vector<1x1x16xf32>
    %230 = vector.shape_cast %229 : vector<1x1x16xf32> to vector<1x16xf32>
    %231 = vector.extract_strided_slice %7 {offsets = [0, 85, 80], sizes = [1, 1, 16], strides = [1, 1, 1]} : vector<1x128x128xf32> to vector<1x1x16xf32>
    %232 = vector.shape_cast %231 : vector<1x1x16xf32> to vector<1x16xf32>
    %233 = vector.extract_strided_slice %7 {offsets = [0, 86, 80], sizes = [1, 1, 16], strides = [1, 1, 1]} : vector<1x128x128xf32> to vector<1x1x16xf32>
    %234 = vector.shape_cast %233 : vector<1x1x16xf32> to vector<1x16xf32>
    %235 = vector.extract_strided_slice %7 {offsets = [0, 87, 80], sizes = [1, 1, 16], strides = [1, 1, 1]} : vector<1x128x128xf32> to vector<1x1x16xf32>
    %236 = vector.shape_cast %235 : vector<1x1x16xf32> to vector<1x16xf32>
    %237 = vector.extract_strided_slice %7 {offsets = [0, 88, 80], sizes = [1, 1, 16], strides = [1, 1, 1]} : vector<1x128x128xf32> to vector<1x1x16xf32>
    %238 = vector.shape_cast %237 : vector<1x1x16xf32> to vector<1x16xf32>
    %239 = vector.extract_strided_slice %7 {offsets = [0, 89, 80], sizes = [1, 1, 16], strides = [1, 1, 1]} : vector<1x128x128xf32> to vector<1x1x16xf32>
    %240 = vector.shape_cast %239 : vector<1x1x16xf32> to vector<1x16xf32>
    %241 = vector.extract_strided_slice %7 {offsets = [0, 90, 80], sizes = [1, 1, 16], strides = [1, 1, 1]} : vector<1x128x128xf32> to vector<1x1x16xf32>
    %242 = vector.shape_cast %241 : vector<1x1x16xf32> to vector<1x16xf32>
    %243 = vector.extract_strided_slice %7 {offsets = [0, 91, 80], sizes = [1, 1, 16], strides = [1, 1, 1]} : vector<1x128x128xf32> to vector<1x1x16xf32>
    %244 = vector.shape_cast %243 : vector<1x1x16xf32> to vector<1x16xf32>
    %245 = vector.extract_strided_slice %7 {offsets = [0, 92, 80], sizes = [1, 1, 16], strides = [1, 1, 1]} : vector<1x128x128xf32> to vector<1x1x16xf32>
    %246 = vector.shape_cast %245 : vector<1x1x16xf32> to vector<1x16xf32>
    %247 = vector.extract_strided_slice %7 {offsets = [0, 93, 80], sizes = [1, 1, 16], strides = [1, 1, 1]} : vector<1x128x128xf32> to vector<1x1x16xf32>
    %248 = vector.shape_cast %247 : vector<1x1x16xf32> to vector<1x16xf32>
    %249 = vector.extract_strided_slice %7 {offsets = [0, 94, 80], sizes = [1, 1, 16], strides = [1, 1, 1]} : vector<1x128x128xf32> to vector<1x1x16xf32>
    %250 = vector.shape_cast %249 : vector<1x1x16xf32> to vector<1x16xf32>
    %251 = vector.extract_strided_slice %7 {offsets = [0, 95, 80], sizes = [1, 1, 16], strides = [1, 1, 1]} : vector<1x128x128xf32> to vector<1x1x16xf32>
    %252 = vector.shape_cast %251 : vector<1x1x16xf32> to vector<1x16xf32>
    %253 = tpu.concatenate %222, %224, %226, %228, %230, %232, %234, %236, %238, %240, %242, %244, %246, %248, %250, %252 in 1 : vector<1x16xf32>, vector<1x16xf32>, vector<1x16xf32>, vector<1x16xf32>, vector<1x16xf32>, vector<1x16xf32>, vector<1x16xf32>, vector<1x16xf32>, vector<1x16xf32>, vector<1x16xf32>, vector<1x16xf32>, vector<1x16xf32>, vector<1x16xf32>, vector<1x16xf32>, vector<1x16xf32>, vector<1x16xf32> -> vector<1x256xf32>
    %254 = arith.mulf %253, %8 : vector<1x256xf32>
    %cst_23 = arith.constant dense<0.000000e+00> : vector<1xf32>
    %255 = vector.multi_reduction <add>, %254, %cst_23 [1] : vector<1x256xf32> to vector<1xf32>
    %256 = vector.shape_cast %255 : vector<1xf32> to vector<1x1xf32>
    %257 = vector.broadcast %256 : vector<1x1xf32> to vector<1x256xf32>
    %258 = arith.divf %253, %257 : vector<1x256xf32>
    %259 = arith.addf %258, %10 : vector<1x256xf32>
    %c0_24 = arith.constant 0 : index
    %c5 = arith.constant 5 : index
    %c0_25 = arith.constant 0 : index
    %260 = vector.load %arg3[%c0_24, %c5, %c0_25] : memref<1x8x256xf32, #tpu.memory_space<vmem>>, vector<1x1x256xf32>
    %261 = vector.shape_cast %260 : vector<1x1x256xf32> to vector<1x256xf32>
    %262 = vector.shape_cast %259 : vector<1x256xf32> to vector<1x1x256xf32>
    tpu.vector_store %arg3[%c0_24, %c5, %c0_25], %262 {strides = array<i32>} : memref<1x8x256xf32, #tpu.memory_space<vmem>>, vector<1x1x256xf32>,
    %263 = vector.extract_strided_slice %7 {offsets = [0, 96, 96], sizes = [1, 1, 16], strides = [1, 1, 1]} : vector<1x128x128xf32> to vector<1x1x16xf32>
    %264 = vector.shape_cast %263 : vector<1x1x16xf32> to vector<1x16xf32>
    %265 = vector.extract_strided_slice %7 {offsets = [0, 97, 96], sizes = [1, 1, 16], strides = [1, 1, 1]} : vector<1x128x128xf32> to vector<1x1x16xf32>
    %266 = vector.shape_cast %265 : vector<1x1x16xf32> to vector<1x16xf32>
    %267 = vector.extract_strided_slice %7 {offsets = [0, 98, 96], sizes = [1, 1, 16], strides = [1, 1, 1]} : vector<1x128x128xf32> to vector<1x1x16xf32>
    %268 = vector.shape_cast %267 : vector<1x1x16xf32> to vector<1x16xf32>
    %269 = vector.extract_strided_slice %7 {offsets = [0, 99, 96], sizes = [1, 1, 16], strides = [1, 1, 1]} : vector<1x128x128xf32> to vector<1x1x16xf32>
    %270 = vector.shape_cast %269 : vector<1x1x16xf32> to vector<1x16xf32>
    %271 = vector.extract_strided_slice %7 {offsets = [0, 100, 96], sizes = [1, 1, 16], strides = [1, 1, 1]} : vector<1x128x128xf32> to vector<1x1x16xf32>
    %272 = vector.shape_cast %271 : vector<1x1x16xf32> to vector<1x16xf32>
    %273 = vector.extract_strided_slice %7 {offsets = [0, 101, 96], sizes = [1, 1, 16], strides = [1, 1, 1]} : vector<1x128x128xf32> to vector<1x1x16xf32>
    %274 = vector.shape_cast %273 : vector<1x1x16xf32> to vector<1x16xf32>
    %275 = vector.extract_strided_slice %7 {offsets = [0, 102, 96], sizes = [1, 1, 16], strides = [1, 1, 1]} : vector<1x128x128xf32> to vector<1x1x16xf32>
    %276 = vector.shape_cast %275 : vector<1x1x16xf32> to vector<1x16xf32>
    %277 = vector.extract_strided_slice %7 {offsets = [0, 103, 96], sizes = [1, 1, 16], strides = [1, 1, 1]} : vector<1x128x128xf32> to vector<1x1x16xf32>
    %278 = vector.shape_cast %277 : vector<1x1x16xf32> to vector<1x16xf32>
    %279 = vector.extract_strided_slice %7 {offsets = [0, 104, 96], sizes = [1, 1, 16], strides = [1, 1, 1]} : vector<1x128x128xf32> to vector<1x1x16xf32>
    %280 = vector.shape_cast %279 : vector<1x1x16xf32> to vector<1x16xf32>
    %281 = vector.extract_strided_slice %7 {offsets = [0, 105, 96], sizes = [1, 1, 16], strides = [1, 1, 1]} : vector<1x128x128xf32> to vector<1x1x16xf32>
    %282 = vector.shape_cast %281 : vector<1x1x16xf32> to vector<1x16xf32>
    %283 = vector.extract_strided_slice %7 {offsets = [0, 106, 96], sizes = [1, 1, 16], strides = [1, 1, 1]} : vector<1x128x128xf32> to vector<1x1x16xf32>
    %284 = vector.shape_cast %283 : vector<1x1x16xf32> to vector<1x16xf32>
    %285 = vector.extract_strided_slice %7 {offsets = [0, 107, 96], sizes = [1, 1, 16], strides = [1, 1, 1]} : vector<1x128x128xf32> to vector<1x1x16xf32>
    %286 = vector.shape_cast %285 : vector<1x1x16xf32> to vector<1x16xf32>
    %287 = vector.extract_strided_slice %7 {offsets = [0, 108, 96], sizes = [1, 1, 16], strides = [1, 1, 1]} : vector<1x128x128xf32> to vector<1x1x16xf32>
    %288 = vector.shape_cast %287 : vector<1x1x16xf32> to vector<1x16xf32>
    %289 = vector.extract_strided_slice %7 {offsets = [0, 109, 96], sizes = [1, 1, 16], strides = [1, 1, 1]} : vector<1x128x128xf32> to vector<1x1x16xf32>
    %290 = vector.shape_cast %289 : vector<1x1x16xf32> to vector<1x16xf32>
    %291 = vector.extract_strided_slice %7 {offsets = [0, 110, 96], sizes = [1, 1, 16], strides = [1, 1, 1]} : vector<1x128x128xf32> to vector<1x1x16xf32>
    %292 = vector.shape_cast %291 : vector<1x1x16xf32> to vector<1x16xf32>
    %293 = vector.extract_strided_slice %7 {offsets = [0, 111, 96], sizes = [1, 1, 16], strides = [1, 1, 1]} : vector<1x128x128xf32> to vector<1x1x16xf32>
    %294 = vector.shape_cast %293 : vector<1x1x16xf32> to vector<1x16xf32>
    %295 = tpu.concatenate %264, %266, %268, %270, %272, %274, %276, %278, %280, %282, %284, %286, %288, %290, %292, %294 in 1 : vector<1x16xf32>, vector<1x16xf32>, vector<1x16xf32>, vector<1x16xf32>, vector<1x16xf32>, vector<1x16xf32>, vector<1x16xf32>, vector<1x16xf32>, vector<1x16xf32>, vector<1x16xf32>, vector<1x16xf32>, vector<1x16xf32>, vector<1x16xf32>, vector<1x16xf32>, vector<1x16xf32>, vector<1x16xf32> -> vector<1x256xf32>
    %296 = arith.mulf %295, %8 : vector<1x256xf32>
    %cst_26 = arith.constant dense<0.000000e+00> : vector<1xf32>
    %297 = vector.multi_reduction <add>, %296, %cst_26 [1] : vector<1x256xf32> to vector<1xf32>
    %298 = vector.shape_cast %297 : vector<1xf32> to vector<1x1xf32>
    %299 = vector.broadcast %298 : vector<1x1xf32> to vector<1x256xf32>
    %300 = arith.divf %295, %299 : vector<1x256xf32>
    %301 = arith.addf %300, %10 : vector<1x256xf32>
    %c0_27 = arith.constant 0 : index
    %c6 = arith.constant 6 : index
    %c0_28 = arith.constant 0 : index
    %302 = vector.load %arg3[%c0_27, %c6, %c0_28] : memref<1x8x256xf32, #tpu.memory_space<vmem>>, vector<1x1x256xf32>
    %303 = vector.shape_cast %302 : vector<1x1x256xf32> to vector<1x256xf32>
    %304 = vector.shape_cast %301 : vector<1x256xf32> to vector<1x1x256xf32>
    tpu.vector_store %arg3[%c0_27, %c6, %c0_28], %304 {strides = array<i32>} : memref<1x8x256xf32, #tpu.memory_space<vmem>>, vector<1x1x256xf32>,
    %305 = vector.extract_strided_slice %7 {offsets = [0, 112, 112], sizes = [1, 1, 16], strides = [1, 1, 1]} : vector<1x128x128xf32> to vector<1x1x16xf32>
    %306 = vector.shape_cast %305 : vector<1x1x16xf32> to vector<1x16xf32>
    %307 = vector.extract_strided_slice %7 {offsets = [0, 113, 112], sizes = [1, 1, 16], strides = [1, 1, 1]} : vector<1x128x128xf32> to vector<1x1x16xf32>
    %308 = vector.shape_cast %307 : vector<1x1x16xf32> to vector<1x16xf32>
    %309 = vector.extract_strided_slice %7 {offsets = [0, 114, 112], sizes = [1, 1, 16], strides = [1, 1, 1]} : vector<1x128x128xf32> to vector<1x1x16xf32>
    %310 = vector.shape_cast %309 : vector<1x1x16xf32> to vector<1x16xf32>
    %311 = vector.extract_strided_slice %7 {offsets = [0, 115, 112], sizes = [1, 1, 16], strides = [1, 1, 1]} : vector<1x128x128xf32> to vector<1x1x16xf32>
    %312 = vector.shape_cast %311 : vector<1x1x16xf32> to vector<1x16xf32>
    %313 = vector.extract_strided_slice %7 {offsets = [0, 116, 112], sizes = [1, 1, 16], strides = [1, 1, 1]} : vector<1x128x128xf32> to vector<1x1x16xf32>
    %314 = vector.shape_cast %313 : vector<1x1x16xf32> to vector<1x16xf32>
    %315 = vector.extract_strided_slice %7 {offsets = [0, 117, 112], sizes = [1, 1, 16], strides = [1, 1, 1]} : vector<1x128x128xf32> to vector<1x1x16xf32>
    %316 = vector.shape_cast %315 : vector<1x1x16xf32> to vector<1x16xf32>
    %317 = vector.extract_strided_slice %7 {offsets = [0, 118, 112], sizes = [1, 1, 16], strides = [1, 1, 1]} : vector<1x128x128xf32> to vector<1x1x16xf32>
    %318 = vector.shape_cast %317 : vector<1x1x16xf32> to vector<1x16xf32>
    %319 = vector.extract_strided_slice %7 {offsets = [0, 119, 112], sizes = [1, 1, 16], strides = [1, 1, 1]} : vector<1x128x128xf32> to vector<1x1x16xf32>
    %320 = vector.shape_cast %319 : vector<1x1x16xf32> to vector<1x16xf32>
    %321 = vector.extract_strided_slice %7 {offsets = [0, 120, 112], sizes = [1, 1, 16], strides = [1, 1, 1]} : vector<1x128x128xf32> to vector<1x1x16xf32>
    %322 = vector.shape_cast %321 : vector<1x1x16xf32> to vector<1x16xf32>
    %323 = vector.extract_strided_slice %7 {offsets = [0, 121, 112], sizes = [1, 1, 16], strides = [1, 1, 1]} : vector<1x128x128xf32> to vector<1x1x16xf32>
    %324 = vector.shape_cast %323 : vector<1x1x16xf32> to vector<1x16xf32>
    %325 = vector.extract_strided_slice %7 {offsets = [0, 122, 112], sizes = [1, 1, 16], strides = [1, 1, 1]} : vector<1x128x128xf32> to vector<1x1x16xf32>
    %326 = vector.shape_cast %325 : vector<1x1x16xf32> to vector<1x16xf32>
    %327 = vector.extract_strided_slice %7 {offsets = [0, 123, 112], sizes = [1, 1, 16], strides = [1, 1, 1]} : vector<1x128x128xf32> to vector<1x1x16xf32>
    %328 = vector.shape_cast %327 : vector<1x1x16xf32> to vector<1x16xf32>
    %329 = vector.extract_strided_slice %7 {offsets = [0, 124, 112], sizes = [1, 1, 16], strides = [1, 1, 1]} : vector<1x128x128xf32> to vector<1x1x16xf32>
    %330 = vector.shape_cast %329 : vector<1x1x16xf32> to vector<1x16xf32>
    %331 = vector.extract_strided_slice %7 {offsets = [0, 125, 112], sizes = [1, 1, 16], strides = [1, 1, 1]} : vector<1x128x128xf32> to vector<1x1x16xf32>
    %332 = vector.shape_cast %331 : vector<1x1x16xf32> to vector<1x16xf32>
    %333 = vector.extract_strided_slice %7 {offsets = [0, 126, 112], sizes = [1, 1, 16], strides = [1, 1, 1]} : vector<1x128x128xf32> to vector<1x1x16xf32>
    %334 = vector.shape_cast %333 : vector<1x1x16xf32> to vector<1x16xf32>
    %335 = vector.extract_strided_slice %7 {offsets = [0, 127, 112], sizes = [1, 1, 16], strides = [1, 1, 1]} : vector<1x128x128xf32> to vector<1x1x16xf32>
    %336 = vector.shape_cast %335 : vector<1x1x16xf32> to vector<1x16xf32>
    %337 = tpu.concatenate %306, %308, %310, %312, %314, %316, %318, %320, %322, %324, %326, %328, %330, %332, %334, %336 in 1 : vector<1x16xf32>, vector<1x16xf32>, vector<1x16xf32>, vector<1x16xf32>, vector<1x16xf32>, vector<1x16xf32>, vector<1x16xf32>, vector<1x16xf32>, vector<1x16xf32>, vector<1x16xf32>, vector<1x16xf32>, vector<1x16xf32>, vector<1x16xf32>, vector<1x16xf32>, vector<1x16xf32>, vector<1x16xf32> -> vector<1x256xf32>
    %338 = arith.mulf %337, %8 : vector<1x256xf32>
    %cst_29 = arith.constant dense<0.000000e+00> : vector<1xf32>
    %339 = vector.multi_reduction <add>, %338, %cst_29 [1] : vector<1x256xf32> to vector<1xf32>
    %340 = vector.shape_cast %339 : vector<1xf32> to vector<1x1xf32>
    %341 = vector.broadcast %340 : vector<1x1xf32> to vector<1x256xf32>
    %342 = arith.divf %337, %341 : vector<1x256xf32>
    %343 = arith.addf %342, %10 : vector<1x256xf32>
    %c0_30 = arith.constant 0 : index
    %c7 = arith.constant 7 : index
    %c0_31 = arith.constant 0 : index
    %344 = vector.load %arg3[%c0_30, %c7, %c0_31] : memref<1x8x256xf32, #tpu.memory_space<vmem>>, vector<1x1x256xf32>
    %345 = vector.shape_cast %344 : vector<1x1x256xf32> to vector<1x256xf32>
    %346 = vector.shape_cast %343 : vector<1x256xf32> to vector<1x1x256xf32>
    tpu.vector_store %arg3[%c0_30, %c7, %c0_31], %346 {strides = array<i32>} : memref<1x8x256xf32, #tpu.memory_space<vmem>>, vector<1x1x256xf32>,
    return
  }
  func.func @transform_0(%arg0: i32) -> (i32, i32, i32) {
    %c0_i32 = arith.constant 0 : i32
    %c0_i32_0 = arith.constant 0 : i32
    %c0_i32_1 = arith.constant 0 : i32
    return %arg0, %c0_i32, %c0_i32_0 : i32, i32, i32
  }
  func.func @transform_1(%arg0: i32) -> (i32, i32) {
    %c0_i32 = arith.constant 0 : i32
    %c0_i32_0 = arith.constant 0 : i32
    %c0_i32_1 = arith.constant 0 : i32
    return %c0_i32, %c0_i32_0 : i32, i32
  }
  func.func @transform_2(%arg0: i32) -> (i32, i32, i32) {
    %c0_i32 = arith.constant 0 : i32
    %c0_i32_0 = arith.constant 0 : i32
    %c0_i32_1 = arith.constant 0 : i32
    return %arg0, %c0_i32, %c0_i32_0 : i32, i32, i32
  }
}

</mosaic_0001>

<llo_original>
// kernel: tpu_custom_call.1
$region0: #{tpu_custom_call.1}
  #allocation0 [shape = 'u32[]', space=smem, size = 0x4, offset = 0x4, fixed_abs, tag = 'smem constant byte address 0x4 - core index']
  #allocation1 [shape = 'u32[144,128]{1,0:T(1,128)}', space=vmem, size = 0x12000, scoped, tag = 'internal scratch']
  %s0 = inlined_call_operand.vmem [shape: f32[1,128,64], index: 0, kind: input, shape index: {}]
  %s1 = inlined_call_operand.vmem [shape: f32[1,256], index: 1, kind: input, shape index: {}]
  %s2 = inlined_call_operand.hbm [shape: f32[1,8,256], index: 2, kind: output, shape index: {}]
  %s3 = sld [smem:[#allocation0]]
  $region18: #{tpu_custom_call.1} parent=0
    _
  %s5 = ssub.s32 1, %s3
  %s6 = scalar_select 0, %s5, %s3
  $region1: #{tpu_custom_call.1} parent=0
    #allocation2 [shape = 'u8[8192]{0}', space=vmem, size = 0x2000, scoped, tag = 'output window, operand 0, single buffered']
    #allocation3 [shape = 's32[1]{0}', space=sflag, size = 0x4, scoped, tag = 'scoped memory for tpu_custom_call.1']
    %7 = vsyncpa [#allocation3], 0
    // Predicated region
    $region2: #{tpu_custom_call.1} parent=1 // pred_check
      _
    $region3: #{tpu_custom_call.1} parent=1 // pred_check_branch
      %9 = sbr.rel (0) target = $region5
    $region4: #{tpu_custom_call.1} parent=1 // pred_region
      _
    $region5: #{tpu_custom_call.1} parent=1 // pred_fallthru
      _
    // Predicated region
    $region6: #{tpu_custom_call.1} parent=1 // pred_check
      _
    $region7: #{tpu_custom_call.1} parent=1 // pred_check_branch
      %11 = sbr.rel (0) target = $region9
    $region8: #{tpu_custom_call.1} parent=1 // pred_region
      _
    $region9: #{tpu_custom_call.1} parent=1 // pred_fallthru
      _
    %v12 = vld [vmem:[%s0] sm:$0xff]
    %v13 = vld [vmem:[%s0 + $0x8] sm:$0xff]
    %v14 = vld [vmem:[%s0 + $0x10] sm:$0xff]
    %v15 = vld [vmem:[%s0 + $0x18] sm:$0xff]
    %v16 = vld [vmem:[%s0 + $0x20] sm:$0xff]
    %v17 = vld [vmem:[%s0 + $0x28] sm:$0xff]
    %v18 = vld [vmem:[%s0 + $0x30] sm:$0xff]
    %v19 = vld [vmem:[%s0 + $0x38] sm:$0xff]
    %v20 = vld [vmem:[%s0 + $0x40] sm:$0xff]
    %v21 = vld [vmem:[%s0 + $0x48] sm:$0xff]
    %v22 = vld [vmem:[%s0 + $0x50] sm:$0xff]
    %v23 = vld [vmem:[%s0 + $0x58] sm:$0xff]
    %v24 = vld [vmem:[%s0 + $0x60] sm:$0xff]
    %v25 = vld [vmem:[%s0 + $0x68] sm:$0xff]
    %v26 = vld [vmem:[%s0 + $0x70] sm:$0xff]
    %v27 = vld [vmem:[%s0 + $0x78] sm:$0xff]
    %vm28 = vcmask 523264
    %v29 = vsel %vm28, %v12, 0.0
    %30 = vadd.xlane.f32.xlu0 %v29
    %v31 = vpop.xlane.xlu0 %30
    %v32 = vsel %vm28, %v13, 0.0
    %33 = vadd.xlane.f32.xlu0 %v32
    %v34 = vpop.xlane.xlu0 %33
    %v35 = vsel %vm28, %v14, 0.0
    %36 = vadd.xlane.f32.xlu0 %v35
    %v37 = vpop.xlane.xlu0 %36
    %v38 = vsel %vm28, %v15, 0.0
    %39 = vadd.xlane.f32.xlu0 %v38
    %v40 = vpop.xlane.xlu0 %39
    %v41 = vsel %vm28, %v16, 0.0
    %42 = vadd.xlane.f32.xlu0 %v41
    %v43 = vpop.xlane.xlu0 %42
    %v44 = vsel %vm28, %v17, 0.0
    %45 = vadd.xlane.f32.xlu0 %v44
    %v46 = vpop.xlane.xlu0 %45
    %v47 = vsel %vm28, %v18, 0.0
    %48 = vadd.xlane.f32.xlu0 %v47
    %v49 = vpop.xlane.xlu0 %48
    %v50 = vsel %vm28, %v19, 0.0
    %51 = vadd.xlane.f32.xlu0 %v50
    %v52 = vpop.xlane.xlu0 %51
    %v53 = vsel %vm28, %v20, 0.0
    %54 = vadd.xlane.f32.xlu0 %v53
    %v55 = vpop.xlane.xlu0 %54
    %v56 = vsel %vm28, %v21, 0.0
    %57 = vadd.xlane.f32.xlu0 %v56
    %v58 = vpop.xlane.xlu0 %57
    %v59 = vsel %vm28, %v22, 0.0
    %60 = vadd.xlane.f32.xlu0 %v59
    %v61 = vpop.xlane.xlu0 %60
    %v62 = vsel %vm28, %v23, 0.0
    %63 = vadd.xlane.f32.xlu0 %v62
    %v64 = vpop.xlane.xlu0 %63
    %v65 = vsel %vm28, %v24, 0.0
    %66 = vadd.xlane.f32.xlu0 %v65
    %v67 = vpop.xlane.xlu0 %66
    %v68 = vsel %vm28, %v25, 0.0
    %69 = vadd.xlane.f32.xlu0 %v68
    %v70 = vpop.xlane.xlu0 %69
    %v71 = vsel %vm28, %v26, 0.0
    %72 = vadd.xlane.f32.xlu0 %v71
    %v73 = vpop.xlane.xlu0 %72
    %v74 = vsel %vm28, %v27, 0.0
    %75 = vadd.xlane.f32.xlu0 %v74
    %v76 = vpop.xlane.xlu0 %75
    %v77 = vrcp.pop 64.0
    %v78 = vmul.f32 %v31, %v77
    %v79 = vmul.f32 %v34, %v77
    %v80 = vmul.f32 %v37, %v77
    %v81 = vmul.f32 %v40, %v77
    %v82 = vmul.f32 %v43, %v77
    %v83 = vmul.f32 %v46, %v77
    %v84 = vmul.f32 %v49, %v77
    %v85 = vmul.f32 %v52, %v77
    %v86 = vmul.f32 %v55, %v77
    %v87 = vmul.f32 %v58, %v77
    %v88 = vmul.f32 %v61, %v77
    %v89 = vmul.f32 %v64, %v77
    %v90 = vmul.f32 %v67, %v77
    %v91 = vmul.f32 %v70, %v77
    %v92 = vmul.f32 %v73, %v77
    %v93 = vmul.f32 %v76, %v77
    %v94 = vsub.f32 %v12, %v78
    %v95 = vsub.f32 %v13, %v79
    %v96 = vsub.f32 %v14, %v80
    %v97 = vsub.f32 %v15, %v81
    %v98 = vsub.f32 %v16, %v82
    %v99 = vsub.f32 %v17, %v83
    %v100 = vsub.f32 %v18, %v84
    %v101 = vsub.f32 %v19, %v85
    %v102 = vsub.f32 %v20, %v86
    %v103 = vsub.f32 %v21, %v87
    %v104 = vsub.f32 %v22, %v88
    %v105 = vsub.f32 %v23, %v89
    %v106 = vsub.f32 %v24, %v90
    %v107 = vsub.f32 %v25, %v91
    %v108 = vsub.f32 %v26, %v92
    %v109 = vsub.f32 %v27, %v93
    %v111 = vsel %vm28, %v94, 0
    %v114 = vsel %vm28, %v95, 0
    %v117 = vsel %vm28, %v96, 0
    %v120 = vsel %vm28, %v97, 0
    %v123 = vsel %vm28, %v98, 0
    %v126 = vsel %vm28, %v99, 0
    %v129 = vsel %vm28, %v100, 0
    %v132 = vsel %vm28, %v101, 0
    %v135 = vsel %vm28, %v102, 0
    %v138 = vsel %vm28, %v103, 0
    %v141 = vsel %vm28, %v104, 0
    %v144 = vsel %vm28, %v105, 0
    %v147 = vsel %vm28, %v106, 0
    %v150 = vsel %vm28, %v107, 0
    %v153 = vsel %vm28, %v108, 0
    %v156 = vsel %vm28, %v109, 0
    %158 = vmatprep.subr.mxu0 0.0
    %159 = vmatpush1.xpose.msra.mxu0 %v111
    %160 = vmatprep.subr.mxu0 0.0
    %161 = vmatpush1.xpose.msra.mxu0 %v114
    %162 = vmatprep.subr.mxu0 0.0
    %163 = vmatpush1.xpose.msra.mxu0 %v117
    %164 = vmatprep.subr.mxu0 0.0
    %165 = vmatpush1.xpose.msra.mxu0 %v120
    %166 = vmatprep.subr.mxu0 0.0
    %167 = vmatpush1.xpose.msra.mxu0 %v123
    %168 = vmatprep.subr.mxu0 0.0
    %169 = vmatpush1.xpose.msra.mxu0 %v126
    %170 = vmatprep.subr.mxu0 0.0
    %171 = vmatpush1.xpose.msra.mxu0 %v129
    %172 = vmatprep.subr.mxu0 0.0
    %173 = vmatpush1.xpose.msra.mxu0 %v132
    %174 = vmatprep.subr.mxu0 0.0
    %175 = vmatpush1.xpose.msra.mxu0 %v135
    %176 = vmatprep.subr.mxu0 0.0
    %177 = vmatpush1.xpose.msra.mxu0 %v138
    %178 = vmatprep.subr.mxu0 0.0
    %179 = vmatpush1.xpose.msra.mxu0 %v141
    %180 = vmatprep.subr.mxu0 0.0
    %181 = vmatpush1.xpose.msra.mxu0 %v144
    %182 = vmatprep.subr.mxu0 0.0
    %183 = vmatpush1.xpose.msra.mxu0 %v147
    %184 = vmatprep.subr.mxu0 0.0
    %185 = vmatpush1.xpose.msra.mxu0 %v150
    %186 = vmatprep.subr.mxu0 0.0
    %187 = vmatpush1.xpose.msra.mxu0 %v153
    %188 = vmatprep.subr.mxu0 0.0
    %189 = vmatpush1.xpose.msra.mxu0 %v156
    %190 = vmatprep.subr.mxu0 0.0
    %191 = vmatpush1.xpose.msra.mxu0 0.0
    %192 = vmatprep.subr.mxu0 0.0
    %193 = vmatpush1.xpose.msra.mxu0 0.0
    %194 = vmatprep.subr.mxu0 0.0
    %195 = vmatpush1.xpose.msra.mxu0 0.0
    %196 = vmatprep.subr.mxu0 0.0
    %197 = vmatpush1.xpose.msra.mxu0 0.0
    %198 = vmatprep.subr.mxu0 0.0
    %199 = vmatpush1.xpose.msra.mxu0 0.0
    %200 = vmatprep.subr.mxu0 0.0
    %201 = vmatpush1.xpose.msra.mxu0 0.0
    %202 = vmatprep.subr.mxu0 0.0
    %203 = vmatpush1.xpose.msra.mxu0 0.0
    %204 = vmatprep.subr.mxu0 0.0
    %205 = vmatpush1.xpose.msra.mxu0 0.0
    %206 = vmatprep.subr.mxu0 0.0
    %207 = vmatpush1.xpose.msra.mxu0 0.0
    %208 = vmatprep.subr.mxu0 0.0
    %209 = vmatpush1.xpose.msra.mxu0 0.0
    %210 = vmatprep.subr.mxu0 0.0
    %211 = vmatpush1.xpose.msra.mxu0 0.0
    %212 = vmatprep.subr.mxu0 0.0
    %213 = vmatpush1.xpose.msra.mxu0 0.0
    %214 = vmatprep.subr.mxu0 0.0
    %215 = vmatpush1.xpose.msra.mxu0 0.0
    %216 = vmatprep.subr.mxu0 0.0
    %217 = vmatpush1.xpose.msra.mxu0 0.0
    %218 = vmatprep.subr.mxu0 0.0
    %219 = vmatpush1.xpose.msra.mxu0 0.0
    %220 = vmatprep.subr.mxu0 0.0
    %221 = vmatpush1.xpose.msra.mxu0 0.0
    %222 = vmatprep.mubr.f32.mxu0 0.0
    %223 = vmatmul.mubr.f32.gmra.mrb[0].mxu0 %v111
    %v224 = vpop.f32.mrb[0].mxu0
    %v225 = vadd.f32 0.0, %v224
    %v226 = vpop.f32.mrb[0].mxu0
    %227 = vmatprep.mubr.f32.mxu0 0.0
    %228 = vmatmul.mubr.f32.gmra.mrb[0].mxu0 %v114
    %v229 = vpop.f32.mrb[0].mxu0
    %v230 = vadd.f32 0.0, %v229
    %v231 = vpop.f32.mrb[0].mxu0
    %232 = vmatprep.mubr.f32.mxu0 0.0
    %233 = vmatmul.mubr.f32.gmra.mrb[0].mxu0 %v117
    %v234 = vpop.f32.mrb[0].mxu0
    %v235 = vadd.f32 0.0, %v234
    %v236 = vpop.f32.mrb[0].mxu0
    %237 = vmatprep.mubr.f32.mxu0 0.0
    %238 = vmatmul.mubr.f32.gmra.mrb[0].mxu0 %v120
    %v239 = vpop.f32.mrb[0].mxu0
    %v240 = vadd.f32 0.0, %v239
    %v241 = vpop.f32.mrb[0].mxu0
    %242 = vmatprep.mubr.f32.mxu0 0.0
    %243 = vmatmul.mubr.f32.gmra.mrb[0].mxu0 %v123
    %v244 = vpop.f32.mrb[0].mxu0
    %v245 = vadd.f32 0.0, %v244
    %v246 = vpop.f32.mrb[0].mxu0
    %247 = vmatprep.mubr.f32.mxu0 0.0
    %248 = vmatmul.mubr.f32.gmra.mrb[0].mxu0 %v126
    %v249 = vpop.f32.mrb[0].mxu0
    %v250 = vadd.f32 0.0, %v249
    %v251 = vpop.f32.mrb[0].mxu0
    %252 = vmatprep.mubr.f32.mxu0 0.0
    %253 = vmatmul.mubr.f32.gmra.mrb[0].mxu0 %v129
    %v254 = vpop.f32.mrb[0].mxu0
    %v255 = vadd.f32 0.0, %v254
    %v256 = vpop.f32.mrb[0].mxu0
    %257 = vmatprep.mubr.f32.mxu0 0.0
    %258 = vmatmul.mubr.f32.gmra.mrb[0].mxu0 %v132
    %v259 = vpop.f32.mrb[0].mxu0
    %v260 = vadd.f32 0.0, %v259
    %v261 = vpop.f32.mrb[0].mxu0
    %262 = vmatprep.mubr.f32.mxu0 0.0
    %263 = vmatmul.mubr.f32.gmra.mrb[0].mxu0 %v135
    %v264 = vpop.f32.mrb[0].mxu0
    %v265 = vadd.f32 0.0, %v264
    %v266 = vpop.f32.mrb[0].mxu0
    %267 = vmatprep.mubr.f32.mxu0 0.0
    %268 = vmatmul.mubr.f32.gmra.mrb[0].mxu0 %v138
    %v269 = vpop.f32.mrb[0].mxu0
    %v270 = vadd.f32 0.0, %v269
    %v271 = vpop.f32.mrb[0].mxu0
    %272 = vmatprep.mubr.f32.mxu0 0.0
    %273 = vmatmul.mubr.f32.gmra.mrb[0].mxu0 %v141
    %v274 = vpop.f32.mrb[0].mxu0
    %v275 = vadd.f32 0.0, %v274
    %v276 = vpop.f32.mrb[0].mxu0
    %277 = vmatprep.mubr.f32.mxu0 0.0
    %278 = vmatmul.mubr.f32.gmra.mrb[0].mxu0 %v144
    %v279 = vpop.f32.mrb[0].mxu0
    %v280 = vadd.f32 0.0, %v279
    %v281 = vpop.f32.mrb[0].mxu0
    %282 = vmatprep.mubr.f32.mxu0 0.0
    %283 = vmatmul.mubr.f32.gmra.mrb[0].mxu0 %v147
    %v284 = vpop.f32.mrb[0].mxu0
    %v285 = vadd.f32 0.0, %v284
    %v286 = vpop.f32.mrb[0].mxu0
    %287 = vmatprep.mubr.f32.mxu0 0.0
    %288 = vmatmul.mubr.f32.gmra.mrb[0].mxu0 %v150
    %v289 = vpop.f32.mrb[0].mxu0
    %v290 = vadd.f32 0.0, %v289
    %v291 = vpop.f32.mrb[0].mxu0
    %292 = vmatprep.mubr.f32.mxu0 0.0
    %293 = vmatmul.mubr.f32.gmra.mrb[0].mxu0 %v153
    %v294 = vpop.f32.mrb[0].mxu0
    %v295 = vadd.f32 0.0, %v294
    %v296 = vpop.f32.mrb[0].mxu0
    %297 = vmatprep.mubr.f32.mxu0 0.0
    %298 = vmatmul.mubr.f32.gmra.mrb[0].mxu0 %v156
    %v299 = vpop.f32.mrb[0].mxu0
    %v300 = vadd.f32 0.0, %v299
    %v301 = vpop.f32.mrb[0].mxu0
    %302 = vdwg.mxu0
    %v303 = vld [vmem:[%s1] sm:$0x3]
    %v304 = vmul.f32 %v303, 1e-05
    %v306 = vrot.slane %v225, 1
    %307 = vrot.lane.b32.xlu0 %v306, 16
    %v308 = vpop.permute.xlu0 %307
    %v310 = vrot.slane %v225, 2
    %311 = vrot.lane.b32.xlu0 %v310, 32
    %v312 = vpop.permute.xlu0 %311
    %v314 = vrot.slane %v225, 3
    %315 = vrot.lane.b32.xlu0 %v314, 48
    %v316 = vpop.permute.xlu0 %315
    %v318 = vrot.slane %v225, 4
    %319 = vrot.lane.b32.xlu0 %v318, 64
    %v320 = vpop.permute.xlu0 %319
    %v322 = vrot.slane %v225, 5
    %323 = vrot.lane.b32.xlu0 %v322, 80
    %v324 = vpop.permute.xlu0 %323
    %v326 = vrot.slane %v225, 6
    %327 = vrot.lane.b32.xlu0 %v326, 96
    %v328 = vpop.permute.xlu0 %327
    %v330 = vrot.slane %v225, 7
    %331 = vrot.lane.b32.xlu0 %v330, 112
    %v332 = vpop.permute.xlu0 %331
    %v335 = vrot.slane %v230, 1
    %336 = vrot.lane.b32.xlu0 %v335, 16
    %v337 = vpop.permute.xlu0 %336
    %v339 = vrot.slane %v230, 2
    %340 = vrot.lane.b32.xlu0 %v339, 32
    %v341 = vpop.permute.xlu0 %340
    %v343 = vrot.slane %v230, 3
    %344 = vrot.lane.b32.xlu0 %v343, 48
    %v345 = vpop.permute.xlu0 %344
    %v347 = vrot.slane %v230, 4
    %348 = vrot.lane.b32.xlu0 %v347, 64
    %v349 = vpop.permute.xlu0 %348
    %v351 = vrot.slane %v230, 5
    %352 = vrot.lane.b32.xlu0 %v351, 80
    %v353 = vpop.permute.xlu0 %352
    %v355 = vrot.slane %v230, 6
    %356 = vrot.lane.b32.xlu0 %v355, 96
    %v357 = vpop.permute.xlu0 %356
    %v359 = vrot.slane %v230, 7
    %360 = vrot.lane.b32.xlu0 %v359, 112
    %v361 = vpop.permute.xlu0 %360
    %vm363 = vcmask 130048
    %v364 = vsel %vm363, %v225, %v308
    %vm365 = vcmask 261120
    %v366 = vsel %vm365, %v364, %v312
    %vm367 = vcmask 392192
    %v368 = vsel %vm367, %v366, %v316
    %v369 = vsel %vm28, %v368, %v320
    %vm370 = vcmask 654336
    %v371 = vsel %vm370, %v369, %v324
    %vm372 = vcmask 785408
    %v373 = vsel %vm372, %v371, %v328
    %vm374 = vcmask 916480
    %v375 = vsel %vm374, %v373, %v332
    %v376 = vsel %vm363, %v230, %v337
    %v377 = vsel %vm365, %v376, %v341
    %v378 = vsel %vm367, %v377, %v345
    %v379 = vsel %vm28, %v378, %v349
    %v380 = vsel %vm370, %v379, %v353
    %v381 = vsel %vm372, %v380, %v357
    %v382 = vsel %vm374, %v381, %v361
    %v384 = vlaneseq
    %v385 = vshrl.u32 %v384, 7
    %v386 = vsub.s32 0, %v385
    %v387 = vrot.slane %v303, %v386
    %v388 = vlaneseq
    %v389 = vshrl.u32 %v388, 7
    %v390 = vsub.s32 1, %v389
    %v391 = vrot.slane %v303, %v390
    %v394 = vmul.f32 %v375, %v387
    %v395 = vmul.f32 %v382, %v391
    %vm396 = vcmask 1040384
    %v397 = vsel %vm396, %v394, 0.0
    %v398 = vsel %vm396, %v395, 0.0
    %v399 = vadd.f32 %v397, %v398
    %400 = vadd.xlane.f32.xlu0 %v399
    %v401 = vpop.xlane.xlu0 %400
    %v402 = vrcp.pop %v401
    %v403 = vmul.f32 %v375, %v402
    %v404 = vmul.f32 %v382, %v402
    %v406 = vlaneseq
    %v407 = vshrl.u32 %v406, 7
    %v408 = vsub.s32 0, %v407
    %v409 = vrot.slane %v304, %v408
    %v410 = vlaneseq
    %v411 = vshrl.u32 %v410, 7
    %v412 = vsub.s32 1, %v411
    %v413 = vrot.slane %v304, %v412
    %v416 = vadd.f32 %v403, %v409
    %v417 = vadd.f32 %v404, %v413
    %v420 = vcombine.low %v416, %v417
    %v422 = vunpack.c.l.s4 1966171168
    %v423 = vunpack.c.0.s8 %v422
    %v424 = vlaneseq
    %v425 = vshrl.u32 %v424, 7
    %v426 = vsub.s32 %v423, %v425
    %v427 = vrot.slane %v420, %v426
    %v429 = vunpack.c.l.s4 1966171168
    %v430 = vunpack.c.0.s8 %v429
    %v431 = vlaneseq
    %v432 = vshrl.u32 %v431, 7
    %v433 = vsub.s32 %v430, %v432
    %v434 = vrot.slane %v427, %v433
    %v436 = vlaneseq
    %vm437 = vcmp.ge.s32.totalorder %v436, 0
    %vm438 = vcmp.lt.s32.totalorder %v436, 256
    %vm439 = vmand %vm437, %vm438
    %440 = vst.msk [vmem:[#allocation2] ss:$8 sm:$0x3] %vm439, %v434
    %441 = vst.msk [vmem:[#allocation2] ss:$8 sm:$0x0] %vm439, %v434
    %443 = vrot.lane.b32.xlu0 %v235, 112
    %v444 = vpop.permute.xlu0 %443
    %v446 = vrot.slane %v235, 1
    %v448 = vrot.slane %v235, 2
    %449 = vrot.lane.b32.xlu0 %v448, 16
    %v450 = vpop.permute.xlu0 %449
    %v452 = vrot.slane %v235, 3
    %453 = vrot.lane.b32.xlu0 %v452, 32
    %v454 = vpop.permute.xlu0 %453
    %v456 = vrot.slane %v235, 4
    %457 = vrot.lane.b32.xlu0 %v456, 48
    %v458 = vpop.permute.xlu0 %457
    %v460 = vrot.slane %v235, 5
    %461 = vrot.lane.b32.xlu0 %v460, 64
    %v462 = vpop.permute.xlu0 %461
    %v464 = vrot.slane %v235, 6
    %465 = vrot.lane.b32.xlu0 %v464, 80
    %v466 = vpop.permute.xlu0 %465
    %v468 = vrot.slane %v235, 7
    %469 = vrot.lane.b32.xlu0 %v468, 96
    %v470 = vpop.permute.xlu0 %469
    %473 = vrot.lane.b32.xlu0 %v240, 112
    %v474 = vpop.permute.xlu0 %473
    %v476 = vrot.slane %v240, 1
    %v478 = vrot.slane %v240, 2
    %479 = vrot.lane.b32.xlu0 %v478, 16
    %v480 = vpop.permute.xlu0 %479
    %v482 = vrot.slane %v240, 3
    %483 = vrot.lane.b32.xlu0 %v482, 32
    %v484 = vpop.permute.xlu0 %483
    %v486 = vrot.slane %v240, 4
    %487 = vrot.lane.b32.xlu0 %v486, 48
    %v488 = vpop.permute.xlu0 %487
    %v490 = vrot.slane %v240, 5
    %491 = vrot.lane.b32.xlu0 %v490, 64
    %v492 = vpop.permute.xlu0 %491
    %v494 = vrot.slane %v240, 6
    %495 = vrot.lane.b32.xlu0 %v494, 80
    %v496 = vpop.permute.xlu0 %495
    %v498 = vrot.slane %v240, 7
    %499 = vrot.lane.b32.xlu0 %v498, 96
    %v500 = vpop.permute.xlu0 %499
    %v502 = vsel %vm363, %v444, %v446
    %v503 = vsel %vm365, %v502, %v450
    %v504 = vsel %vm367, %v503, %v454
    %v505 = vsel %vm28, %v504, %v458
    %v506 = vsel %vm370, %v505, %v462
    %v507 = vsel %vm372, %v506, %v466
    %v508 = vsel %vm374, %v507, %v470
    %v509 = vsel %vm363, %v474, %v476
    %v510 = vsel %vm365, %v509, %v480
    %v511 = vsel %vm367, %v510, %v484
    %v512 = vsel %vm28, %v511, %v488
    %v513 = vsel %vm370, %v512, %v492
    %v514 = vsel %vm372, %v513, %v496
    %v515 = vsel %vm374, %v514, %v500
    %v516 = vmul.f32 %v508, %v387
    %v517 = vmul.f32 %v515, %v391
    %v518 = vsel %vm396, %v516, 0.0
    %v519 = vsel %vm396, %v517, 0.0
    %v520 = vadd.f32 %v518, %v519
    %521 = vadd.xlane.f32.xlu0 %v520
    %v522 = vpop.xlane.xlu0 %521
    %v523 = vrcp.pop %v522
    %v524 = vmul.f32 %v508, %v523
    %v525 = vmul.f32 %v515, %v523
    %v526 = vadd.f32 %v524, %v409
    %v527 = vadd.f32 %v525, %v413
    %v530 = vcombine.low %v526, %v527
    %v532 = vunpack.c.l.s4 1966171168
    %v533 = vunpack.c.0.s8 %v532
    %v534 = vlaneseq
    %v535 = vshrl.u32 %v534, 7
    %v536 = vsub.s32 %v533, %v535
    %v537 = vrot.slane %v530, %v536
    %v539 = vunpack.c.l.s4 1966171168
    %v540 = vunpack.c.0.s8 %v539
    %v541 = vlaneseq
    %v542 = vshrl.u32 %v541, 7
    %v543 = vsub.s32 %v540, %v542
    %v544 = vrot.slane %v537, %v543
    %s546 = scalar_lea.vmem [#allocation2], 1
    %547 = vst.msk [vmem:[%s546] ss:$8 sm:$0x3] %vm439, %v544
    %548 = vst.msk [vmem:[%s546] ss:$8 sm:$0x0] %vm439, %v544
    %550 = vrot.lane.b32.xlu0 %v245, 96
    %v551 = vpop.permute.xlu0 %550
    %v553 = vrot.slane %v245, 1
    %554 = vrot.lane.b32.xlu0 %v553, 112
    %v555 = vpop.permute.xlu0 %554
    %v557 = vrot.slane %v245, 2
    %v559 = vrot.slane %v245, 3
    %560 = vrot.lane.b32.xlu0 %v559, 16
    %v561 = vpop.permute.xlu0 %560
    %v563 = vrot.slane %v245, 4
    %564 = vrot.lane.b32.xlu0 %v563, 32
    %v565 = vpop.permute.xlu0 %564
    %v567 = vrot.slane %v245, 5
    %568 = vrot.lane.b32.xlu0 %v567, 48
    %v569 = vpop.permute.xlu0 %568
    %v571 = vrot.slane %v245, 6
    %572 = vrot.lane.b32.xlu0 %v571, 64
    %v573 = vpop.permute.xlu0 %572
    %v575 = vrot.slane %v245, 7
    %576 = vrot.lane.b32.xlu0 %v575, 80
    %v577 = vpop.permute.xlu0 %576
    %580 = vrot.lane.b32.xlu0 %v250, 96
    %v581 = vpop.permute.xlu0 %580
    %v583 = vrot.slane %v250, 1
    %584 = vrot.lane.b32.xlu0 %v583, 112
    %v585 = vpop.permute.xlu0 %584
    %v587 = vrot.slane %v250, 2
    %v589 = vrot.slane %v250, 3
    %590 = vrot.lane.b32.xlu0 %v589, 16
    %v591 = vpop.permute.xlu0 %590
    %v593 = vrot.slane %v250, 4
    %594 = vrot.lane.b32.xlu0 %v593, 32
    %v595 = vpop.permute.xlu0 %594
    %v597 = vrot.slane %v250, 5
    %598 = vrot.lane.b32.xlu0 %v597, 48
    %v599 = vpop.permute.xlu0 %598
    %v601 = vrot.slane %v250, 6
    %602 = vrot.lane.b32.xlu0 %v601, 64
    %v603 = vpop.permute.xlu0 %602
    %v605 = vrot.slane %v250, 7
    %606 = vrot.lane.b32.xlu0 %v605, 80
    %v607 = vpop.permute.xlu0 %606
    %v609 = vsel %vm363, %v551, %v555
    %v610 = vsel %vm365, %v609, %v557
    %v611 = vsel %vm367, %v610, %v561
    %v612 = vsel %vm28, %v611, %v565
    %v613 = vsel %vm370, %v612, %v569
    %v614 = vsel %vm372, %v613, %v573
    %v615 = vsel %vm374, %v614, %v577
    %v616 = vsel %vm363, %v581, %v585
    %v617 = vsel %vm365, %v616, %v587
    %v618 = vsel %vm367, %v617, %v591
    %v619 = vsel %vm28, %v618, %v595
    %v620 = vsel %vm370, %v619, %v599
    %v621 = vsel %vm372, %v620, %v603
    %v622 = vsel %vm374, %v621, %v607
    %v623 = vmul.f32 %v615, %v387
    %v624 = vmul.f32 %v622, %v391
    %v625 = vsel %vm396, %v623, 0.0
    %v626 = vsel %vm396, %v624, 0.0
    %v627 = vadd.f32 %v625, %v626
    %628 = vadd.xlane.f32.xlu0 %v627
    %v629 = vpop.xlane.xlu0 %628
    %v630 = vrcp.pop %v629
    %v631 = vmul.f32 %v615, %v630
    %v632 = vmul.f32 %v622, %v630
    %v633 = vadd.f32 %v631, %v409
    %v634 = vadd.f32 %v632, %v413
    %v637 = vcombine.low %v633, %v634
    %v639 = vunpack.c.l.s4 1966171168
    %v640 = vunpack.c.0.s8 %v639
    %v641 = vlaneseq
    %v642 = vshrl.u32 %v641, 7
    %v643 = vsub.s32 %v640, %v642
    %v644 = vrot.slane %v637, %v643
    %v646 = vunpack.c.l.s4 1966171168
    %v647 = vunpack.c.0.s8 %v646
    %v648 = vlaneseq
    %v649 = vshrl.u32 %v648, 7
    %v650 = vsub.s32 %v647, %v649
    %v651 = vrot.slane %v644, %v650
    %s653 = scalar_lea.vmem [#allocation2], 2
    %654 = vst.msk [vmem:[%s653] ss:$8 sm:$0x3] %vm439, %v651
    %655 = vst.msk [vmem:[%s653] ss:$8 sm:$0x0] %vm439, %v651
    %657 = vrot.lane.b32.xlu0 %v255, 80
    %v658 = vpop.permute.xlu0 %657
    %v660 = vrot.slane %v255, 1
    %661 = vrot.lane.b32.xlu0 %v660, 96
    %v662 = vpop.permute.xlu0 %661
    %v664 = vrot.slane %v255, 2
    %665 = vrot.lane.b32.xlu0 %v664, 112
    %v666 = vpop.permute.xlu0 %665
    %v668 = vrot.slane %v255, 3
    %v670 = vrot.slane %v255, 4
    %671 = vrot.lane.b32.xlu0 %v670, 16
    %v672 = vpop.permute.xlu0 %671
    %v674 = vrot.slane %v255, 5
    %675 = vrot.lane.b32.xlu0 %v674, 32
    %v676 = vpop.permute.xlu0 %675
    %v678 = vrot.slane %v255, 6
    %679 = vrot.lane.b32.xlu0 %v678, 48
    %v680 = vpop.permute.xlu0 %679
    %v682 = vrot.slane %v255, 7
    %683 = vrot.lane.b32.xlu0 %v682, 64
    %v684 = vpop.permute.xlu0 %683
    %687 = vrot.lane.b32.xlu0 %v260, 80
    %v688 = vpop.permute.xlu0 %687
    %v690 = vrot.slane %v260, 1
    %691 = vrot.lane.b32.xlu0 %v690, 96
    %v692 = vpop.permute.xlu0 %691
    %v694 = vrot.slane %v260, 2
    %695 = vrot.lane.b32.xlu0 %v694, 112
    %v696 = vpop.permute.xlu0 %695
    %v698 = vrot.slane %v260, 3
    %v700 = vrot.slane %v260, 4
    %701 = vrot.lane.b32.xlu0 %v700, 16
    %v702 = vpop.permute.xlu0 %701
    %v704 = vrot.slane %v260, 5
    %705 = vrot.lane.b32.xlu0 %v704, 32
    %v706 = vpop.permute.xlu0 %705
    %v708 = vrot.slane %v260, 6
    %709 = vrot.lane.b32.xlu0 %v708, 48
    %v710 = vpop.permute.xlu0 %709
    %v712 = vrot.slane %v260, 7
    %713 = vrot.lane.b32.xlu0 %v712, 64
    %v714 = vpop.permute.xlu0 %713
    %v716 = vsel %vm363, %v658, %v662
    %v717 = vsel %vm365, %v716, %v666
    %v718 = vsel %vm367, %v717, %v668
    %v719 = vsel %vm28, %v718, %v672
    %v720 = vsel %vm370, %v719, %v676
    %v721 = vsel %vm372, %v720, %v680
    %v722 = vsel %vm374, %v721, %v684
    %v723 = vsel %vm363, %v688, %v692
    %v724 = vsel %vm365, %v723, %v696
    %v725 = vsel %vm367, %v724, %v698
    %v726 = vsel %vm28, %v725, %v702
    %v727 = vsel %vm370, %v726, %v706
    %v728 = vsel %vm372, %v727, %v710
    %v729 = vsel %vm374, %v728, %v714
    %v730 = vmul.f32 %v722, %v387
    %v731 = vmul.f32 %v729, %v391
    %v732 = vsel %vm396, %v730, 0.0
    %v733 = vsel %vm396, %v731, 0.0
    %v734 = vadd.f32 %v732, %v733
    %735 = vadd.xlane.f32.xlu0 %v734
    %v736 = vpop.xlane.xlu0 %735
    %v737 = vrcp.pop %v736
    %v738 = vmul.f32 %v722, %v737
    %v739 = vmul.f32 %v729, %v737
    %v740 = vadd.f32 %v738, %v409
    %v741 = vadd.f32 %v739, %v413
    %v744 = vcombine.low %v740, %v741
    %v746 = vunpack.c.l.s4 1966171168
    %v747 = vunpack.c.0.s8 %v746
    %v748 = vlaneseq
    %v749 = vshrl.u32 %v748, 7
    %v750 = vsub.s32 %v747, %v749
    %v751 = vrot.slane %v744, %v750
    %v753 = vunpack.c.l.s4 1966171168
    %v754 = vunpack.c.0.s8 %v753
    %v755 = vlaneseq
    %v756 = vshrl.u32 %v755, 7
    %v757 = vsub.s32 %v754, %v756
    %v758 = vrot.slane %v751, %v757
    %s760 = scalar_lea.vmem [#allocation2], 3
    %761 = vst.msk [vmem:[%s760] ss:$8 sm:$0x3] %vm439, %v758
    %762 = vst.msk [vmem:[%s760] ss:$8 sm:$0x0] %vm439, %v758
    %764 = vrot.lane.b32.xlu0 %v265, 64
    %v765 = vpop.permute.xlu0 %764
    %v767 = vrot.slane %v265, 1
    %768 = vrot.lane.b32.xlu0 %v767, 80
    %v769 = vpop.permute.xlu0 %768
    %v771 = vrot.slane %v265, 2
    %772 = vrot.lane.b32.xlu0 %v771, 96
    %v773 = vpop.permute.xlu0 %772
    %v775 = vrot.slane %v265, 3
    %776 = vrot.lane.b32.xlu0 %v775, 112
    %v777 = vpop.permute.xlu0 %776
    %v779 = vrot.slane %v265, 4
    %v781 = vrot.slane %v265, 5
    %782 = vrot.lane.b32.xlu0 %v781, 16
    %v783 = vpop.permute.xlu0 %782
    %v785 = vrot.slane %v265, 6
    %786 = vrot.lane.b32.xlu0 %v785, 32
    %v787 = vpop.permute.xlu0 %786
    %v789 = vrot.slane %v265, 7
    %790 = vrot.lane.b32.xlu0 %v789, 48
    %v791 = vpop.permute.xlu0 %790
    %794 = vrot.lane.b32.xlu0 %v270, 64
    %v795 = vpop.permute.xlu0 %794
    %v797 = vrot.slane %v270, 1
    %798 = vrot.lane.b32.xlu0 %v797, 80
    %v799 = vpop.permute.xlu0 %798
    %v801 = vrot.slane %v270, 2
    %802 = vrot.lane.b32.xlu0 %v801, 96
    %v803 = vpop.permute.xlu0 %802
    %v805 = vrot.slane %v270, 3
    %806 = vrot.lane.b32.xlu0 %v805, 112
    %v807 = vpop.permute.xlu0 %806
    %v809 = vrot.slane %v270, 4
    %v811 = vrot.slane %v270, 5
    %812 = vrot.lane.b32.xlu0 %v811, 16
    %v813 = vpop.permute.xlu0 %812
    %v815 = vrot.slane %v270, 6
    %816 = vrot.lane.b32.xlu0 %v815, 32
    %v817 = vpop.permute.xlu0 %816
    %v819 = vrot.slane %v270, 7
    %820 = vrot.lane.b32.xlu0 %v819, 48
    %v821 = vpop.permute.xlu0 %820
    %v823 = vsel %vm363, %v765, %v769
    %v824 = vsel %vm365, %v823, %v773
    %v825 = vsel %vm367, %v824, %v777
    %v826 = vsel %vm28, %v825, %v779
    %v827 = vsel %vm370, %v826, %v783
    %v828 = vsel %vm372, %v827, %v787
    %v829 = vsel %vm374, %v828, %v791
    %v830 = vsel %vm363, %v795, %v799
    %v831 = vsel %vm365, %v830, %v803
    %v832 = vsel %vm367, %v831, %v807
    %v833 = vsel %vm28, %v832, %v809
    %v834 = vsel %vm370, %v833, %v813
    %v835 = vsel %vm372, %v834, %v817
    %v836 = vsel %vm374, %v835, %v821
    %v837 = vmul.f32 %v829, %v387
    %v838 = vmul.f32 %v836, %v391
    %v839 = vsel %vm396, %v837, 0.0
    %v840 = vsel %vm396, %v838, 0.0
    %v841 = vadd.f32 %v839, %v840
    %842 = vadd.xlane.f32.xlu0 %v841
    %v843 = vpop.xlane.xlu0 %842
    %v844 = vrcp.pop %v843
    %v845 = vmul.f32 %v829, %v844
    %v846 = vmul.f32 %v836, %v844
    %v847 = vadd.f32 %v845, %v409
    %v848 = vadd.f32 %v846, %v413
    %v851 = vcombine.low %v847, %v848
    %v853 = vunpack.c.l.s4 1966171168
    %v854 = vunpack.c.0.s8 %v853
    %v855 = vlaneseq
    %v856 = vshrl.u32 %v855, 7
    %v857 = vsub.s32 %v854, %v856
    %v858 = vrot.slane %v851, %v857
    %v860 = vunpack.c.l.s4 1966171168
    %v861 = vunpack.c.0.s8 %v860
    %v862 = vlaneseq
    %v863 = vshrl.u32 %v862, 7
    %v864 = vsub.s32 %v861, %v863
    %v865 = vrot.slane %v858, %v864
    %s867 = scalar_lea.vmem [#allocation2], 4
    %868 = vst.msk [vmem:[%s867] ss:$8 sm:$0x3] %vm439, %v865
    %869 = vst.msk [vmem:[%s867] ss:$8 sm:$0x0] %vm439, %v865
    %871 = vrot.lane.b32.xlu0 %v275, 48
    %v872 = vpop.permute.xlu0 %871
    %v874 = vrot.slane %v275, 1
    %875 = vrot.lane.b32.xlu0 %v874, 64
    %v876 = vpop.permute.xlu0 %875
    %v878 = vrot.slane %v275, 2
    %879 = vrot.lane.b32.xlu0 %v878, 80
    %v880 = vpop.permute.xlu0 %879
    %v882 = vrot.slane %v275, 3
    %883 = vrot.lane.b32.xlu0 %v882, 96
    %v884 = vpop.permute.xlu0 %883
    %v886 = vrot.slane %v275, 4
    %887 = vrot.lane.b32.xlu0 %v886, 112
    %v888 = vpop.permute.xlu0 %887
    %v890 = vrot.slane %v275, 5
    %v892 = vrot.slane %v275, 6
    %893 = vrot.lane.b32.xlu0 %v892, 16
    %v894 = vpop.permute.xlu0 %893
    %v896 = vrot.slane %v275, 7
    %897 = vrot.lane.b32.xlu0 %v896, 32
    %v898 = vpop.permute.xlu0 %897
    %901 = vrot.lane.b32.xlu0 %v280, 48
    %v902 = vpop.permute.xlu0 %901
    %v904 = vrot.slane %v280, 1
    %905 = vrot.lane.b32.xlu0 %v904, 64
    %v906 = vpop.permute.xlu0 %905
    %v908 = vrot.slane %v280, 2
    %909 = vrot.lane.b32.xlu0 %v908, 80
    %v910 = vpop.permute.xlu0 %909
    %v912 = vrot.slane %v280, 3
    %913 = vrot.lane.b32.xlu0 %v912, 96
    %v914 = vpop.permute.xlu0 %913
    %v916 = vrot.slane %v280, 4
    %917 = vrot.lane.b32.xlu0 %v916, 112
    %v918 = vpop.permute.xlu0 %917
    %v920 = vrot.slane %v280, 5
    %v922 = vrot.slane %v280, 6
    %923 = vrot.lane.b32.xlu0 %v922, 16
    %v924 = vpop.permute.xlu0 %923
    %v926 = vrot.slane %v280, 7
    %927 = vrot.lane.b32.xlu0 %v926, 32
    %v928 = vpop.permute.xlu0 %927
    %v930 = vsel %vm363, %v872, %v876
    %v931 = vsel %vm365, %v930, %v880
    %v932 = vsel %vm367, %v931, %v884
    %v933 = vsel %vm28, %v932, %v888
    %v934 = vsel %vm370, %v933, %v890
    %v935 = vsel %vm372, %v934, %v894
    %v936 = vsel %vm374, %v935, %v898
    %v937 = vsel %vm363, %v902, %v906
    %v938 = vsel %vm365, %v937, %v910
    %v939 = vsel %vm367, %v938, %v914
    %v940 = vsel %vm28, %v939, %v918
    %v941 = vsel %vm370, %v940, %v920
    %v942 = vsel %vm372, %v941, %v924
    %v943 = vsel %vm374, %v942, %v928
    %v944 = vmul.f32 %v936, %v387
    %v945 = vmul.f32 %v943, %v391
    %v946 = vsel %vm396, %v944, 0.0
    %v947 = vsel %vm396, %v945, 0.0
    %v948 = vadd.f32 %v946, %v947
    %949 = vadd.xlane.f32.xlu0 %v948
    %v950 = vpop.xlane.xlu0 %949
    %v951 = vrcp.pop %v950
    %v952 = vmul.f32 %v936, %v951
    %v953 = vmul.f32 %v943, %v951
    %v954 = vadd.f32 %v952, %v409
    %v955 = vadd.f32 %v953, %v413
    %v958 = vcombine.low %v954, %v955
    %v960 = vunpack.c.l.s4 1966171168
    %v961 = vunpack.c.0.s8 %v960
    %v962 = vlaneseq
    %v963 = vshrl.u32 %v962, 7
    %v964 = vsub.s32 %v961, %v963
    %v965 = vrot.slane %v958, %v964
    %v967 = vunpack.c.l.s4 1966171168
    %v968 = vunpack.c.0.s8 %v967
    %v969 = vlaneseq
    %v970 = vshrl.u32 %v969, 7
    %v971 = vsub.s32 %v968, %v970
    %v972 = vrot.slane %v965, %v971
    %s974 = scalar_lea.vmem [#allocation2], 5
    %975 = vst.msk [vmem:[%s974] ss:$8 sm:$0x3] %vm439, %v972
    %976 = vst.msk [vmem:[%s974] ss:$8 sm:$0x0] %vm439, %v972
    %978 = vrot.lane.b32.xlu0 %v285, 32
    %v979 = vpop.permute.xlu0 %978
    %v981 = vrot.slane %v285, 1
    %982 = vrot.lane.b32.xlu0 %v981, 48
    %v983 = vpop.permute.xlu0 %982
    %v985 = vrot.slane %v285, 2
    %986 = vrot.lane.b32.xlu0 %v985, 64
    %v987 = vpop.permute.xlu0 %986
    %v989 = vrot.slane %v285, 3
    %990 = vrot.lane.b32.xlu0 %v989, 80
    %v991 = vpop.permute.xlu0 %990
    %v993 = vrot.slane %v285, 4
    %994 = vrot.lane.b32.xlu0 %v993, 96
    %v995 = vpop.permute.xlu0 %994
    %v997 = vrot.slane %v285, 5
    %998 = vrot.lane.b32.xlu0 %v997, 112
    %v999 = vpop.permute.xlu0 %998
    %v1001 = vrot.slane %v285, 6
    %v1003 = vrot.slane %v285, 7
    %1004 = vrot.lane.b32.xlu0 %v1003, 16
    %v1005 = vpop.permute.xlu0 %1004
    %1008 = vrot.lane.b32.xlu0 %v290, 32
    %v1009 = vpop.permute.xlu0 %1008
    %v1011 = vrot.slane %v290, 1
    %1012 = vrot.lane.b32.xlu0 %v1011, 48
    %v1013 = vpop.permute.xlu0 %1012
    %v1015 = vrot.slane %v290, 2
    %1016 = vrot.lane.b32.xlu0 %v1015, 64
    %v1017 = vpop.permute.xlu0 %1016
    %v1019 = vrot.slane %v290, 3
    %1020 = vrot.lane.b32.xlu0 %v1019, 80
    %v1021 = vpop.permute.xlu0 %1020
    %v1023 = vrot.slane %v290, 4
    %1024 = vrot.lane.b32.xlu0 %v1023, 96
    %v1025 = vpop.permute.xlu0 %1024
    %v1027 = vrot.slane %v290, 5
    %1028 = vrot.lane.b32.xlu0 %v1027, 112
    %v1029 = vpop.permute.xlu0 %1028
    %v1031 = vrot.slane %v290, 6
    %v1033 = vrot.slane %v290, 7
    %1034 = vrot.lane.b32.xlu0 %v1033, 16
    %v1035 = vpop.permute.xlu0 %1034
    %v1037 = vsel %vm363, %v979, %v983
    %v1038 = vsel %vm365, %v1037, %v987
    %v1039 = vsel %vm367, %v1038, %v991
    %v1040 = vsel %vm28, %v1039, %v995
    %v1041 = vsel %vm370, %v1040, %v999
    %v1042 = vsel %vm372, %v1041, %v1001
    %v1043 = vsel %vm374, %v1042, %v1005
    %v1044 = vsel %vm363, %v1009, %v1013
    %v1045 = vsel %vm365, %v1044, %v1017
    %v1046 = vsel %vm367, %v1045, %v1021
    %v1047 = vsel %vm28, %v1046, %v1025
    %v1048 = vsel %vm370, %v1047, %v1029
    %v1049 = vsel %vm372, %v1048, %v1031
    %v1050 = vsel %vm374, %v1049, %v1035
    %v1051 = vmul.f32 %v1043, %v387
    %v1052 = vmul.f32 %v1050, %v391
    %v1053 = vsel %vm396, %v1051, 0.0
    %v1054 = vsel %vm396, %v1052, 0.0
    %v1055 = vadd.f32 %v1053, %v1054
    %1056 = vadd.xlane.f32.xlu0 %v1055
    %v1057 = vpop.xlane.xlu0 %1056
    %v1058 = vrcp.pop %v1057
    %v1059 = vmul.f32 %v1043, %v1058
    %v1060 = vmul.f32 %v1050, %v1058
    %v1061 = vadd.f32 %v1059, %v409
    %v1062 = vadd.f32 %v1060, %v413
    %v1065 = vcombine.low %v1061, %v1062
    %v1067 = vunpack.c.l.s4 1966171168
    %v1068 = vunpack.c.0.s8 %v1067
    %v1069 = vlaneseq
    %v1070 = vshrl.u32 %v1069, 7
    %v1071 = vsub.s32 %v1068, %v1070
    %v1072 = vrot.slane %v1065, %v1071
    %v1074 = vunpack.c.l.s4 1966171168
    %v1075 = vunpack.c.0.s8 %v1074
    %v1076 = vlaneseq
    %v1077 = vshrl.u32 %v1076, 7
    %v1078 = vsub.s32 %v1075, %v1077
    %v1079 = vrot.slane %v1072, %v1078
    %s1081 = scalar_lea.vmem [#allocation2], 6
    %1082 = vst.msk [vmem:[%s1081] ss:$8 sm:$0x3] %vm439, %v1079
    %1083 = vst.msk [vmem:[%s1081] ss:$8 sm:$0x0] %vm439, %v1079
    %1085 = vrot.lane.b32.xlu0 %v295, 16
    %v1086 = vpop.permute.xlu0 %1085
    %v1088 = vrot.slane %v295, 1
    %1089 = vrot.lane.b32.xlu0 %v1088, 32
    %v1090 = vpop.permute.xlu0 %1089
    %v1092 = vrot.slane %v295, 2
    %1093 = vrot.lane.b32.xlu0 %v1092, 48
    %v1094 = vpop.permute.xlu0 %1093
    %v1096 = vrot.slane %v295, 3
    %1097 = vrot.lane.b32.xlu0 %v1096, 64
    %v1098 = vpop.permute.xlu0 %1097
    %v1100 = vrot.slane %v295, 4
    %1101 = vrot.lane.b32.xlu0 %v1100, 80
    %v1102 = vpop.permute.xlu0 %1101
    %v1104 = vrot.slane %v295, 5
    %1105 = vrot.lane.b32.xlu0 %v1104, 96
    %v1106 = vpop.permute.xlu0 %1105
    %v1108 = vrot.slane %v295, 6
    %1109 = vrot.lane.b32.xlu0 %v1108, 112
    %v1110 = vpop.permute.xlu0 %1109
    %v1112 = vrot.slane %v295, 7
    %1115 = vrot.lane.b32.xlu0 %v300, 16
    %v1116 = vpop.permute.xlu0 %1115
    %v1118 = vrot.slane %v300, 1
    %1119 = vrot.lane.b32.xlu0 %v1118, 32
    %v1120 = vpop.permute.xlu0 %1119
    %v1122 = vrot.slane %v300, 2
    %1123 = vrot.lane.b32.xlu0 %v1122, 48
    %v1124 = vpop.permute.xlu0 %1123
    %v1126 = vrot.slane %v300, 3
    %1127 = vrot.lane.b32.xlu0 %v1126, 64
    %v1128 = vpop.permute.xlu0 %1127
    %v1130 = vrot.slane %v300, 4
    %1131 = vrot.lane.b32.xlu0 %v1130, 80
    %v1132 = vpop.permute.xlu0 %1131
    %v1134 = vrot.slane %v300, 5
    %1135 = vrot.lane.b32.xlu0 %v1134, 96
    %v1136 = vpop.permute.xlu0 %1135
    %v1138 = vrot.slane %v300, 6
    %1139 = vrot.lane.b32.xlu0 %v1138, 112
    %v1140 = vpop.permute.xlu0 %1139
    %v1142 = vrot.slane %v300, 7
    %v1144 = vsel %vm363, %v1086, %v1090
    %v1145 = vsel %vm365, %v1144, %v1094
    %v1146 = vsel %vm367, %v1145, %v1098
    %v1147 = vsel %vm28, %v1146, %v1102
    %v1148 = vsel %vm370, %v1147, %v1106
    %v1149 = vsel %vm372, %v1148, %v1110
    %v1150 = vsel %vm374, %v1149, %v1112
    %v1151 = vsel %vm363, %v1116, %v1120
    %v1152 = vsel %vm365, %v1151, %v1124
    %v1153 = vsel %vm367, %v1152, %v1128
    %v1154 = vsel %vm28, %v1153, %v1132
    %v1155 = vsel %vm370, %v1154, %v1136
    %v1156 = vsel %vm372, %v1155, %v1140
    %v1157 = vsel %vm374, %v1156, %v1142
    %v1158 = vmul.f32 %v1150, %v387
    %v1159 = vmul.f32 %v1157, %v391
    %v1160 = vsel %vm396, %v1158, 0.0
    %v1161 = vsel %vm396, %v1159, 0.0
    %v1162 = vadd.f32 %v1160, %v1161
    %1163 = vadd.xlane.f32.xlu0 %v1162
    %v1164 = vpop.xlane.xlu0 %1163
    %v1165 = vrcp.pop %v1164
    %v1166 = vmul.f32 %v1150, %v1165
    %v1167 = vmul.f32 %v1157, %v1165
    %v1168 = vadd.f32 %v1166, %v409
    %v1169 = vadd.f32 %v1167, %v413
    %v1172 = vcombine.low %v1168, %v1169
    %v1174 = vunpack.c.l.s4 1966171168
    %v1175 = vunpack.c.0.s8 %v1174
    %v1176 = vlaneseq
    %v1177 = vshrl.u32 %v1176, 7
    %v1178 = vsub.s32 %v1175, %v1177
    %v1179 = vrot.slane %v1172, %v1178
    %v1181 = vunpack.c.l.s4 1966171168
    %v1182 = vunpack.c.0.s8 %v1181
    %v1183 = vlaneseq
    %v1184 = vshrl.u32 %v1183, 7
    %v1185 = vsub.s32 %v1182, %v1184
    %v1186 = vrot.slane %v1179, %v1185
    %s1188 = scalar_lea.vmem [#allocation2], 7
    %1189 = vst.msk [vmem:[%s1188] ss:$8 sm:$0x3] %vm439, %v1186
    %1190 = vst.msk [vmem:[%s1188] ss:$8 sm:$0x0] %vm439, %v1186
    // Predicated region
    $region10: #{tpu_custom_call.1} parent=1 // pred_check
      _
    $region11: #{tpu_custom_call.1} parent=1 // pred_check_branch
      %1192 = sbr.rel (0) target = $region13
    $region12: #{tpu_custom_call.1} parent=1 // pred_region
      %s1194 = ssub.s32 256, 256
      %1195 = vsyncadd [#allocation3], %s1194
      %s1197 = sshll.u32 [#allocation2], 4
      %s1198 = int_to_ptr.vmem [resolvable:$true] %s1197
      %1200 = dma.vmem_to_hbm [thread:$0]  %s1198, 256, %s2, [#allocation3]
    $region13: #{tpu_custom_call.1} parent=1 // pred_fallthru
      _
    // Predicated region
    $region14: #{tpu_custom_call.1} parent=1 // pred_check
      _
    $region15: #{tpu_custom_call.1} parent=1 // pred_check_branch
      %1202 = sbr.rel (0) target = $region17
    $region16: #{tpu_custom_call.1} parent=1 // pred_region
      %1203 = dma.done [#allocation3], 256
    $region17: #{tpu_custom_call.1} parent=1 // pred_fallthru
      _
    %1204 = vsyncpa [#allocation3], 1

</llo_original>
